<compile_context>
chip_gen: v7x
topology: tpu7x:2x2x1
jax: 0.10.0
libtpu: 0.0.40
codegen_flags: <defaults>
</compile_context>

<pallas_src>
import functools

import jax
import jax.numpy as jnp
from jax.experimental import pallas as pl
from jax.experimental.pallas import tpu as pltpu


# 64 MiB scoped-VMEM cap: well above the 16 MiB (v5e) / 32 MiB (v6e, v7x)
# defaults, and still within physical VMEM on every generation (v7x = 64 MiB).
# TODO(synk): ~100 MiB is better on v5e/v6e (128 MiB physical) if generation
# is known at trace time.
_VMEM_LIMIT = 64 * 1024 * 1024


# ----------------------------------------------------------------------------
# Tiling helper
# ----------------------------------------------------------------------------
def _pick_tile(dim, target, align):
    """Largest tile <= target that divides dim and is a multiple of `align`;
    falls back to the full dimension (always legal for BlockSpec)."""
    if dim <= target:
        return dim
    t = (min(target, dim) // align) * align
    while t >= align:
        if dim % t == 0:
            return t
        t -= align
    return dim


def _apply_act(y, activation):
    if activation == "gelu":
        # TODO(synk): HF BERT uses exact erf GELU; tanh approximation kept for
        # guaranteed Mosaic lowering (tiny numeric divergence).
        return jax.nn.gelu(y, approximate=True)
    if activation == "tanh":
        return jnp.tanh(y)
    return y


# ----------------------------------------------------------------------------
# Fused linear:  y = act(x @ w + b)
#   * full-K path (K resident in VMEM, 2-D grid, no accumulator) for K <= 4096
#   * K-tiled fp32-accumulator fallback for larger K
# ----------------------------------------------------------------------------
def _linear_fullk_kernel(x_ref, w_ref, b_ref, o_ref, *, activation):
    y = jnp.dot(x_ref[...], w_ref[...], preferred_element_type=jnp.float32)
    y = y + b_ref[...].astype(jnp.float32)
    y = _apply_act(y, activation)
    o_ref[...] = y.astype(o_ref.dtype)


def _linear_ktiled_kernel(x_ref, w_ref, b_ref, o_ref, acc_ref, *, activation):
    @pl.when(pl.program_id(2) == 0)
    def _():
        acc_ref[...] = jnp.zeros_like(acc_ref)

    acc_ref[...] += jnp.dot(x_ref[...], w_ref[...],
                            preferred_element_type=jnp.float32)

    @pl.when(pl.program_id(2) == pl.num_programs(2) - 1)
    def _():
        y = acc_ref[...] + b_ref[...].astype(jnp.float32)
        y = _apply_act(y, activation)
        o_ref[...] = y.astype(o_ref.dtype)


def linear(x, w, b, activation=None, out_dtype=jnp.bfloat16):
    """x: (M, K) bf16, w: (K, N) bf16, b: (N,) fp32 -> (M, N) out_dtype."""
    M, K = x.shape
    N = w.shape[1]
    # Large row tiles: weight HBM re-streaming scales with 1/TM; TM=1024 keeps
    # VMEM ~24 MiB worst-case for BERT-scale K=3072 (fits v7x with the raised
    # limit).  TN stays lane-dense and >= 512 where possible.
    TM = _pick_tile(M, 1024, 8)
    TN = _pick_tile(N, 512, 128)
    b2 = b.reshape(1, N)

    if K <= 4096:
        # Full-K: x row panel DMA'd once per row-tile (index ignores j), weight
        # streamed once per (i, j); no per-k accumulator RMW, no k grid steps.
        kern = functools.partial(_linear_fullk_kernel, activation=activation)
        return pl.pallas_call(
            kern,
            out_shape=jax.ShapeDtypeStruct((M, N), out_dtype),
            grid=(M // TM, N // TN),
            in_specs=[
                pl.BlockSpec((TM, K), lambda i, j: (i, 0)),
                pl.BlockSpec((K, TN), lambda i, j: (0, j)),
                pl.BlockSpec((1, TN), lambda i, j: (0, j)),
            ],
            out_specs=pl.BlockSpec((TM, TN), lambda i, j: (i, j)),
            compiler_params=pltpu.CompilerParams(
                dimension_semantics=("parallel", "parallel"),
                vmem_limit_bytes=_VMEM_LIMIT),
        )(x, w, b2)

    # Fallback for very large K: tiled reduction with fp32 VMEM accumulator.
    # TODO(synk): on v5e add pipeline_mode=pl.Buffered(3) to the weight spec if
    # DMA is still exposed after enlarging tiles.
    TK = _pick_tile(K, 1024, 128)
    kern = functools.partial(_linear_ktiled_kernel, activation=activation)
    return pl.pallas_call(
        kern,
        out_shape=jax.ShapeDtypeStruct((M, N), out_dtype),
        grid=(M // TM, N // TN, K // TK),
        in_specs=[
            pl.BlockSpec((TM, TK), lambda i, j, k: (i, k)),
            pl.BlockSpec((TK, TN), lambda i, j, k: (k, j)),
            pl.BlockSpec((1, TN), lambda i, j, k: (0, j)),
        ],
        out_specs=pl.BlockSpec((TM, TN), lambda i, j, k: (i, j)),
        scratch_shapes=[pltpu.VMEM((TM, TN), jnp.float32)],
        compiler_params=pltpu.CompilerParams(
            dimension_semantics=("parallel", "parallel", "arbitrary"),
            vmem_limit_bytes=_VMEM_LIMIT),
    )(x, w, b2)


# ----------------------------------------------------------------------------
# LayerNorm (optionally fused with the residual add), fp32 statistics
# ----------------------------------------------------------------------------
def _layernorm_kernel(*refs, eps, has_residual):
    if has_residual:
        x_ref, r_ref, g_ref, b_ref, o_ref = refs
        x = x_ref[...].astype(jnp.float32) + r_ref[...].astype(jnp.float32)
    else:
        x_ref, g_ref, b_ref, o_ref = refs
        x = x_ref[...].astype(jnp.float32)
    mu = jnp.mean(x, axis=-1, keepdims=True)
    var = jnp.mean(jnp.square(x - mu), axis=-1, keepdims=True)
    y = (x - mu) * jax.lax.rsqrt(var + eps)
    y = y * g_ref[...].astype(jnp.float32) + b_ref[...].astype(jnp.float32)
    o_ref[...] = y.astype(o_ref.dtype)


def layernorm(x, gamma, beta, residual=None, eps=1e-12, out_dtype=jnp.bfloat16):
    """x (and optional residual): (M, H); gamma/beta: (H,)."""
    M, H = x.shape
    # Purely mem-bound: big row tiles (~85% of HBM roofline at 512-1024 rows).
    TM = _pick_tile(M, 1024, 8)
    grid = (M // TM,)
    has_res = residual is not None
    in_specs = [pl.BlockSpec((TM, H), lambda i: (i, 0))]
    args = [x]
    if has_res:
        in_specs.append(pl.BlockSpec((TM, H), lambda i: (i, 0)))
        args.append(residual)
    in_specs += [pl.BlockSpec((1, H), lambda i: (0, 0)),
                 pl.BlockSpec((1, H), lambda i: (0, 0))]
    args += [gamma.reshape(1, H), beta.reshape(1, H)]
    kern = functools.partial(_layernorm_kernel, eps=eps, has_residual=has_res)
    return pl.pallas_call(
        kern,
        out_shape=jax.ShapeDtypeStruct((M, H), out_dtype),
        grid=grid,
        in_specs=in_specs,
        out_specs=pl.BlockSpec((TM, H), lambda i: (i, 0)),
        compiler_params=pltpu.CompilerParams(
            dimension_semantics=("parallel",),
            vmem_limit_bytes=_VMEM_LIMIT),
    )(*args)


# ----------------------------------------------------------------------------
# Attention: per-batch kernel over the fused (S, 3H) QKV slab.
# Heads are split in-kernel with static per-head ref slices; softmax in fp32;
# 1/sqrt(Dh) folded into q; per-head probs / ctx stored directly (no
# concatenate, no full-slab value kept live).
# ----------------------------------------------------------------------------
def _attention_kernel(qkv_ref, bias_ref, *out_refs, scale, heads, hidden,
                      output_probs):
    if output_probs:
        probs_ref, ctx_ref = out_refs
    else:
        (ctx_ref,) = out_refs
    Dh = hidden // heads
    bias = bias_ref[0].astype(jnp.float32)          # (1, S) additive key mask
    for h in range(heads):                          # static unroll over heads
        q0, k0, v0 = h * Dh, hidden + h * Dh, 2 * hidden + h * Dh
        # Fold the 1/sqrt(Dh) scale into q: S*Dh multiplies instead of S*S.
        qh = qkv_ref[0, :, q0:q0 + Dh] * scale      # (S, Dh) bf16
        kh = qkv_ref[0, :, k0:k0 + Dh]
        vh = qkv_ref[0, :, v0:v0 + Dh]
        # q @ k^T without an explicit transpose: contract over the Dh axis.
        s = jax.lax.dot_general(qh, kh, (((1,), (1,)), ((), ())),
                                preferred_element_type=jnp.float32)
        s = s + bias
        m = jnp.max(s, axis=-1, keepdims=True)
        e = jnp.exp(s - m)
        inv = pl.reciprocal(jnp.sum(e, axis=-1, keepdims=True), approx=False)
        p = e * inv
        if output_probs:
            probs_ref[0, h] = p.astype(probs_ref.dtype)
        ctx_ref[0, :, q0:q0 + Dh] = jnp.dot(
            p.astype(vh.dtype), vh,
            preferred_element_type=jnp.float32).astype(ctx_ref.dtype)


def attention(qkv, mask_bias, scale, heads, output_attentions=True,
              probs_dtype=jnp.bfloat16):
    """qkv: (B, S, 3*hidden) bf16; mask_bias: (B, 1, S) fp32 additive.
    Returns (probs (B, H, S, S) or None, ctx (B, S, hidden) bf16)."""
    B, S, H3 = qkv.shape
    hidden = H3 // 3
    kern = functools.partial(_attention_kernel, scale=scale, heads=heads,
                             hidden=hidden, output_probs=output_attentions)
    out_shape, out_specs = [], []
    if output_attentions:
        # NOTE: probs emitted bf16 (halves the dominant HBM writeback); the HF
        # reference returns fp32 attentions — loosen tolerances when comparing.
        out_shape.append(jax.ShapeDtypeStruct((B, heads, S, S), probs_dtype))
        out_specs.append(pl.BlockSpec((1, heads, S, S), lambda b: (b, 0, 0, 0)))
    out_shape.append(jax.ShapeDtypeStruct((B, S, hidden), jnp.bfloat16))
    out_specs.append(pl.BlockSpec((1, S, hidden), lambda b: (b, 0, 0)))

    outs = pl.pallas_call(
        kern,
        out_shape=tuple(out_shape),
        grid=(B,),
        in_specs=[
            pl.BlockSpec((1, S, H3), lambda b: (b, 0, 0)),
            pl.BlockSpec((1, 1, S), lambda b: (b, 0, 0)),
        ],
        out_specs=tuple(out_specs),
        compiler_params=pltpu.CompilerParams(
            dimension_semantics=("parallel",),
            vmem_limit_bytes=_VMEM_LIMIT),
    )(qkv, mask_bias)

    if output_attentions:
        probs, ctx = outs
        return probs, ctx
    ctx = outs[0] if isinstance(outs, (tuple, list)) else outs
    return None, ctx


# ----------------------------------------------------------------------------
# Model (BERT-style encoder for sequence classification)
# ----------------------------------------------------------------------------
def init_params(key, *, vocab_size, max_pos, hidden, heads, layers,
                intermediate, num_labels):
    def dense(k, fan_in, fan_out, dtype=jnp.bfloat16):
        return (0.02 * jax.random.normal(k, (fan_in, fan_out), jnp.float32)).astype(dtype)

    keys = iter(jax.random.split(key, 8 + layers * 8))
    p = {
        "word_emb": dense(next(keys), vocab_size, hidden),
        "pos_emb": dense(next(keys), max_pos, hidden),
        "type_emb": dense(next(keys), 2, hidden),
        "emb_ln_g": jnp.ones((hidden,), jnp.float32),
        "emb_ln_b": jnp.zeros((hidden,), jnp.float32),
        "layers": [],
        # pooler / classifier are tiny and stay in XLA — keep fp32
        "pool_w": dense(next(keys), hidden, hidden, jnp.float32),
        "pool_b": jnp.zeros((hidden,), jnp.float32),
        "cls_w": dense(next(keys), hidden, num_labels, jnp.float32),
        "cls_b": jnp.zeros((num_labels,), jnp.float32),
    }
    for _ in range(layers):
        lp = {
            # fused QKV projection: one (H, 3H) matmul instead of three (H, H)
            "wqkv": dense(next(keys), hidden, 3 * hidden),
            "bqkv": jnp.zeros((3 * hidden,), jnp.float32),
            "wo": dense(next(keys), hidden, hidden),
            "bo": jnp.zeros((hidden,), jnp.float32),
            "ln1_g": jnp.ones((hidden,), jnp.float32),
            "ln1_b": jnp.zeros((hidden,), jnp.float32),
            "w1": dense(next(keys), hidden, intermediate),
            "b1": jnp.zeros((intermediate,), jnp.float32),
            "w2": dense(next(keys), intermediate, hidden),
            "b2": jnp.zeros((hidden,), jnp.float32),
            "ln2_g": jnp.ones((hidden,), jnp.float32),
            "ln2_b": jnp.zeros((hidden,), jnp.float32),
        }
        p["layers"].append(lp)
    return p


def transformer_forward(params, input_ids, attention_mask, labels=None, *,
                        heads, output_attentions=True):
    B, S = input_ids.shape
    hidden = params["word_emb"].shape[1]
    Dh = hidden // heads
    scale = 1.0 / (Dh ** 0.5)

    # Embeddings: gather + adds are glue; layernorm is a Pallas kernel.
    emb = (jnp.take(params["word_emb"], input_ids, axis=0)
           + params["pos_emb"][None, :S, :]
           + params["type_emb"][0][None, None, :]).astype(jnp.bfloat16)
    x = layernorm(emb.reshape(B * S, hidden), params["emb_ln_g"], params["emb_ln_b"])

    mask_bias = (1.0 - attention_mask.astype(jnp.float32))[:, None, :] * -1e9  # (B, 1, S)

    attentions = []
    for lp in params["layers"]:
        qkv = linear(x, lp["wqkv"], lp["bqkv"])                       # (B*S, 3H)
        probs, ctx = attention(qkv.reshape(B, S, 3 * hidden), mask_bias, scale,
                               heads, output_attentions=output_attentions)
        if output_attentions:
            attentions.append(probs)                                  # (B, H, S, S)

        attn_out = linear(ctx.reshape(B * S, hidden), lp["wo"], lp["bo"])
        x = layernorm(attn_out, lp["ln1_g"], lp["ln1_b"], residual=x)  # fused residual

        h = linear(x, lp["w1"], lp["b1"], activation="gelu")
        h = linear(h, lp["w2"], lp["b2"])
        x = layernorm(h, lp["ln2_g"], lp["ln2_b"], residual=x)        # fused residual

    # Pooler + classifier: M=B, N=num_labels — left to XLA (kernel launch would
    # cost more than the compute; output lanes would be >98% masked).
    cls = x.reshape(B, S, hidden)[:, 0, :].astype(jnp.float32)
    pooled = jnp.tanh(cls @ params["pool_w"] + params["pool_b"])
    logits = pooled @ params["cls_w"] + params["cls_b"]

    loss = None
    if labels is not None:
        logp = jax.nn.log_softmax(logits, axis=-1)
        loss = -jnp.mean(jnp.take_along_axis(logp, labels[:, None], axis=-1))

    return {"logits": logits, "loss": loss, "attention": tuple(attentions)}


# ----------------------------------------------------------------------------
# Main
# ----------------------------------------------------------------------------
if __name__ == "__main__":
    # Small-config "bert-like" model: hidden=32, 4 heads, 2 layers, seq=8, batch=2.
    VOCAB, MAX_POS, HIDDEN, HEADS, LAYERS, INTER, NUM_LABELS = 50, 16, 32, 4, 2, 64, 2
    B, S = 2, 8

    key = jax.random.PRNGKey(0)
    k_params, k_ids, k_labels = jax.random.split(key, 3)

    params = init_params(k_params, vocab_size=VOCAB, max_pos=MAX_POS, hidden=HIDDEN,
                         heads=HEADS, layers=LAYERS, intermediate=INTER,
                         num_labels=NUM_LABELS)

    input_ids = jax.random.randint(k_ids, (B, S), 0, VOCAB, dtype=jnp.int32)
    attention_mask = jnp.ones((B, S), dtype=jnp.int32).at[1, 6:].set(0)  # pad tail of 2nd example
    labels = jax.random.randint(k_labels, (B,), 0, NUM_LABELS, dtype=jnp.int32)

    fwd = jax.jit(functools.partial(transformer_forward, heads=HEADS))
    out = fwd(params, input_ids, attention_mask, labels)
    jax.block_until_ready(out["logits"])
    jax.block_until_ready(out["loss"])
    jax.block_until_ready(out["attention"])

    assert out["logits"].shape == (B, NUM_LABELS)
    assert out["loss"].shape == ()
    assert len(out["attention"]) == LAYERS and out["attention"][0].shape == (B, HEADS, S, S)
    print("KERNEL_OK")
</pallas_src>

<mosaic_0001>
module attributes {stable_mosaic.version = 11 : i64} {
  func.func @_layernorm_kernel(%arg0: i32, %arg1: memref<16x32xbf16, #tpu.memory_space<vmem>>, %arg2: memref<1x32xf32, #tpu.memory_space<vmem>>, %arg3: memref<1x32xf32, #tpu.memory_space<vmem>>, %arg4: memref<16x32xbf16, #tpu.memory_space<vmem>>) attributes {dimension_semantics = [#tpu.dimension_semantics<parallel>], iteration_bounds = array<i64: 1>, scalar_prefetch = 0 : i64, scratch_operands = 0 : i64, tpu.core_type = #tpu.core_type<tc>, window_params = [{transform_indices = @transform_0, window_bounds = array<i64: 16, 32>}, {pipeline_mode = #tpu.pipeline_mode<synchronous>, transform_indices = @transform_1, window_bounds = array<i64: 1, 32>}, {pipeline_mode = #tpu.pipeline_mode<synchronous>, transform_indices = @transform_2, window_bounds = array<i64: 1, 32>}, {transform_indices = @transform_3, window_bounds = array<i64: 16, 32>}]} {
    %c0 = arith.constant 0 : index
    %c0_0 = arith.constant 0 : index
    %0 = vector.load %arg1[%c0, %c0_0] : memref<16x32xbf16, #tpu.memory_space<vmem>>, vector<16x32xbf16>
    %1 = arith.extf %0 : vector<16x32xbf16> to vector<16x32xf32>
    %cst = arith.constant dense<0.000000e+00> : vector<16xf32>
    %2 = vector.multi_reduction <add>, %1, %cst [1] : vector<16x32xf32> to vector<16xf32>
    %3 = vector.shape_cast %2 : vector<16xf32> to vector<16x1xf32>
    %cst_1 = arith.constant 3.200000e+01 : f32
    %4 = vector.broadcast %cst_1 : f32 to vector<16x1xf32>
    %5 = arith.divf %3, %4 : vector<16x1xf32>
    %6 = vector.broadcast %5 : vector<16x1xf32> to vector<16x32xf32>
    %7 = arith.subf %1, %6 : vector<16x32xf32>
    %8 = arith.mulf %7, %7 : vector<16x32xf32>
    %cst_2 = arith.constant dense<0.000000e+00> : vector<16xf32>
    %9 = vector.multi_reduction <add>, %8, %cst_2 [1] : vector<16x32xf32> to vector<16xf32>
    %10 = vector.shape_cast %9 : vector<16xf32> to vector<16x1xf32>
    %cst_3 = arith.constant 3.200000e+01 : f32
    %11 = vector.broadcast %cst_3 : f32 to vector<16x1xf32>
    %12 = arith.divf %10, %11 : vector<16x1xf32>
    %13 = vector.broadcast %5 : vector<16x1xf32> to vector<16x32xf32>
    %14 = arith.subf %1, %13 : vector<16x32xf32>
    %cst_4 = arith.constant 9.99999996E-13 : f32
    %15 = vector.broadcast %cst_4 : f32 to vector<16x1xf32>
    %16 = arith.addf %12, %15 : vector<16x1xf32>
    %17 = math.rsqrt %16 : vector<16x1xf32>
    %18 = vector.broadcast %17 : vector<16x1xf32> to vector<16x32xf32>
    %19 = arith.mulf %14, %18 : vector<16x32xf32>
    %c0_5 = arith.constant 0 : index
    %c0_6 = arith.constant 0 : index
    %20 = vector.load %arg2[%c0_5, %c0_6] : memref<1x32xf32, #tpu.memory_space<vmem>>, vector<1x32xf32>
    %21 = vector.broadcast %20 : vector<1x32xf32> to vector<16x32xf32>
    %22 = arith.mulf %19, %21 : vector<16x32xf32>
    %c0_7 = arith.constant 0 : index
    %c0_8 = arith.constant 0 : index
    %23 = vector.load %arg3[%c0_7, %c0_8] : memref<1x32xf32, #tpu.memory_space<vmem>>, vector<1x32xf32>
    %24 = vector.broadcast %23 : vector<1x32xf32> to vector<16x32xf32>
    %25 = arith.addf %22, %24 : vector<16x32xf32>
    %26 = arith.truncf %25 : vector<16x32xf32> to vector<16x32xbf16>
    %c0_9 = arith.constant 0 : index
    %c0_10 = arith.constant 0 : index
    %27 = vector.load %arg4[%c0_9, %c0_10] : memref<16x32xbf16, #tpu.memory_space<vmem>>, vector<16x32xbf16>
    tpu.vector_store %arg4[%c0_9, %c0_10], %26 {strides = array<i32>} : memref<16x32xbf16, #tpu.memory_space<vmem>>, vector<16x32xbf16>,
    return
  }
  func.func @transform_0(%arg0: i32) -> (i32, i32) {
    %c0_i32 = arith.constant 0 : i32
    %c0_i32_0 = arith.constant 0 : i32
    return %arg0, %c0_i32 : i32, i32
  }
  func.func @transform_1(%arg0: i32) -> (i32, i32) {
    %c0_i32 = arith.constant 0 : i32
    %c0_i32_0 = arith.constant 0 : i32
    %c0_i32_1 = arith.constant 0 : i32
    return %c0_i32, %c0_i32_0 : i32, i32
  }
  func.func @transform_2(%arg0: i32) -> (i32, i32) {
    %c0_i32 = arith.constant 0 : i32
    %c0_i32_0 = arith.constant 0 : i32
    %c0_i32_1 = arith.constant 0 : i32
    return %c0_i32, %c0_i32_0 : i32, i32
  }
  func.func @transform_3(%arg0: i32) -> (i32, i32) {
    %c0_i32 = arith.constant 0 : i32
    %c0_i32_0 = arith.constant 0 : i32
    return %arg0, %c0_i32 : i32, i32
  }
}

module attributes {stable_mosaic.version = 11 : i64} {
  func.func @_linear_fullk_kernel(%arg0: i32, %arg1: i32, %arg2: memref<16x32xbf16, #tpu.memory_space<vmem>>, %arg3: memref<32x96xbf16, #tpu.memory_space<vmem>>, %arg4: memref<1x96xf32, #tpu.memory_space<vmem>>, %arg5: memref<16x96xbf16, #tpu.memory_space<vmem>>) attributes {dimension_semantics = [#tpu.dimension_semantics<parallel>, #tpu.dimension_semantics<parallel>], iteration_bounds = array<i64: 1, 1>, scalar_prefetch = 0 : i64, scratch_operands = 0 : i64, tpu.core_type = #tpu.core_type<tc>, window_params = [{transform_indices = @transform_0, window_bounds = array<i64: 16, 32>}, {transform_indices = @transform_1, window_bounds = array<i64: 32, 96>}, {transform_indices = @transform_2, window_bounds = array<i64: 1, 96>}, {transform_indices = @transform_3, window_bounds = array<i64: 16, 96>}]} {
    %c0 = arith.constant 0 : index
    %c0_0 = arith.constant 0 : index
    %0 = vector.load %arg2[%c0, %c0_0] : memref<16x32xbf16, #tpu.memory_space<vmem>>, vector<16x32xbf16>
    %c0_1 = arith.constant 0 : index
    %c0_2 = arith.constant 0 : index
    %1 = vector.load %arg3[%c0_1, %c0_2] : memref<32x96xbf16, #tpu.memory_space<vmem>>, vector<32x96xbf16>
    %cst = arith.constant dense<0.000000e+00> : vector<16x96xf32>
    %2 = tpu.matmul %0, %1, %cst {dimension_numbers = #tpu.dot_dimension_numbers<[1], [0], [0], [1], [0, 0, 1, 1], [], []>} : vector<16x32xbf16>, vector<32x96xbf16>, vector<16x96xf32> -> vector<16x96xf32>
    %c0_3 = arith.constant 0 : index
    %c0_4 = arith.constant 0 : index
    %3 = vector.load %arg4[%c0_3, %c0_4] : memref<1x96xf32, #tpu.memory_space<vmem>>, vector<1x96xf32>
    %4 = vector.broadcast %3 : vector<1x96xf32> to vector<16x96xf32>
    %5 = arith.addf %2, %4 : vector<16x96xf32>
    %6 = arith.truncf %5 : vector<16x96xf32> to vector<16x96xbf16>
    %c0_5 = arith.constant 0 : index
    %c0_6 = arith.constant 0 : index
    %7 = vector.load %arg5[%c0_5, %c0_6] : memref<16x96xbf16, #tpu.memory_space<vmem>>, vector<16x96xbf16>
    tpu.vector_store %arg5[%c0_5, %c0_6], %6 {strides = array<i32>} : memref<16x96xbf16, #tpu.memory_space<vmem>>, vector<16x96xbf16>,
    return
  }
  func.func @transform_0(%arg0: i32, %arg1: i32) -> (i32, i32) {
    %c0_i32 = arith.constant 0 : i32
    %c0_i32_0 = arith.constant 0 : i32
    return %arg0, %c0_i32 : i32, i32
  }
  func.func @transform_1(%arg0: i32, %arg1: i32) -> (i32, i32) {
    %c0_i32 = arith.constant 0 : i32
    %c0_i32_0 = arith.constant 0 : i32
    return %c0_i32, %arg1 : i32, i32
  }
  func.func @transform_2(%arg0: i32, %arg1: i32) -> (i32, i32) {
    %c0_i32 = arith.constant 0 : i32
    %c0_i32_0 = arith.constant 0 : i32
    return %c0_i32, %arg1 : i32, i32
  }
  func.func @transform_3(%arg0: i32, %arg1: i32) -> (i32, i32) {
    %c0_i32 = arith.constant 0 : i32
    return %arg0, %arg1 : i32, i32
  }
}

module attributes {stable_mosaic.version = 11 : i64} {
  func.func @_linear_fullk_kernel(%arg0: i32, %arg1: i32, %arg2: memref<16x32xbf16, #tpu.memory_space<vmem>>, %arg3: memref<32x32xbf16, #tpu.memory_space<vmem>>, %arg4: memref<1x32xf32, #tpu.memory_space<vmem>>, %arg5: memref<16x32xbf16, #tpu.memory_space<vmem>>) attributes {dimension_semantics = [#tpu.dimension_semantics<parallel>, #tpu.dimension_semantics<parallel>], iteration_bounds = array<i64: 1, 1>, scalar_prefetch = 0 : i64, scratch_operands = 0 : i64, tpu.core_type = #tpu.core_type<tc>, window_params = [{transform_indices = @transform_0, window_bounds = array<i64: 16, 32>}, {transform_indices = @transform_1, window_bounds = array<i64: 32, 32>}, {transform_indices = @transform_2, window_bounds = array<i64: 1, 32>}, {transform_indices = @transform_3, window_bounds = array<i64: 16, 32>}]} {
    %c0 = arith.constant 0 : index
    %c0_0 = arith.constant 0 : index
    %0 = vector.load %arg2[%c0, %c0_0] : memref<16x32xbf16, #tpu.memory_space<vmem>>, vector<16x32xbf16>
    %c0_1 = arith.constant 0 : index
    %c0_2 = arith.constant 0 : index
    %1 = vector.load %arg3[%c0_1, %c0_2] : memref<32x32xbf16, #tpu.memory_space<vmem>>, vector<32x32xbf16>
    %cst = arith.constant dense<0.000000e+00> : vector<16x32xf32>
    %2 = tpu.matmul %0, %1, %cst {dimension_numbers = #tpu.dot_dimension_numbers<[1], [0], [0], [1], [0, 0, 1, 1], [], []>} : vector<16x32xbf16>, vector<32x32xbf16>, vector<16x32xf32> -> vector<16x32xf32>
    %c0_3 = arith.constant 0 : index
    %c0_4 = arith.constant 0 : index
    %3 = vector.load %arg4[%c0_3, %c0_4] : memref<1x32xf32, #tpu.memory_space<vmem>>, vector<1x32xf32>
    %4 = vector.broadcast %3 : vector<1x32xf32> to vector<16x32xf32>
    %5 = arith.addf %2, %4 : vector<16x32xf32>
    %6 = arith.truncf %5 : vector<16x32xf32> to vector<16x32xbf16>
    %c0_5 = arith.constant 0 : index
    %c0_6 = arith.constant 0 : index
    %7 = vector.load %arg5[%c0_5, %c0_6] : memref<16x32xbf16, #tpu.memory_space<vmem>>, vector<16x32xbf16>
    tpu.vector_store %arg5[%c0_5, %c0_6], %6 {strides = array<i32>} : memref<16x32xbf16, #tpu.memory_space<vmem>>, vector<16x32xbf16>,
    return
  }
  func.func @transform_0(%arg0: i32, %arg1: i32) -> (i32, i32) {
    %c0_i32 = arith.constant 0 : i32
    %c0_i32_0 = arith.constant 0 : i32
    return %arg0, %c0_i32 : i32, i32
  }
  func.func @transform_1(%arg0: i32, %arg1: i32) -> (i32, i32) {
    %c0_i32 = arith.constant 0 : i32
    %c0_i32_0 = arith.constant 0 : i32
    return %c0_i32, %arg1 : i32, i32
  }
  func.func @transform_2(%arg0: i32, %arg1: i32) -> (i32, i32) {
    %c0_i32 = arith.constant 0 : i32
    %c0_i32_0 = arith.constant 0 : i32
    return %c0_i32, %arg1 : i32, i32
  }
  func.func @transform_3(%arg0: i32, %arg1: i32) -> (i32, i32) {
    %c0_i32 = arith.constant 0 : i32
    return %arg0, %arg1 : i32, i32
  }
}

module attributes {stable_mosaic.version = 11 : i64} {
  func.func @_attention_kernel(%arg0: i32, %arg1: memref<1x8x96xbf16, #tpu.memory_space<vmem>>, %arg2: memref<1x1x8xf32, #tpu.memory_space<vmem>>, %arg3: memref<1x4x8x8xbf16, #tpu.memory_space<vmem>>, %arg4: memref<1x8x32xbf16, #tpu.memory_space<vmem>>) attributes {dimension_semantics = [#tpu.dimension_semantics<parallel>], iteration_bounds = array<i64: 2>, scalar_prefetch = 0 : i64, scratch_operands = 0 : i64, tpu.core_type = #tpu.core_type<tc>, window_params = [{transform_indices = @transform_0, window_bounds = array<i64: 1, 8, 96>}, {transform_indices = @transform_1, window_bounds = array<i64: 1, 1, 8>}, {transform_indices = @transform_2, window_bounds = array<i64: 1, 4, 8, 8>}, {transform_indices = @transform_3, window_bounds = array<i64: 1, 8, 32>}]} {
    %c0 = arith.constant 0 : index
    %c0_0 = arith.constant 0 : index
    %c0_1 = arith.constant 0 : index
    %0 = vector.load %arg2[%c0, %c0_0, %c0_1] : memref<1x1x8xf32, #tpu.memory_space<vmem>>, vector<1x1x8xf32>
    %1 = vector.shape_cast %0 : vector<1x1x8xf32> to vector<1x8xf32>
    %c0_2 = arith.constant 0 : index
    %c0_3 = arith.constant 0 : index
    %c0_4 = arith.constant 0 : index
    %2 = vector.load %arg1[%c0_2, %c0_3, %c0_4] : memref<1x8x96xbf16, #tpu.memory_space<vmem>>, vector<1x8x8xbf16>
    %3 = vector.shape_cast %2 : vector<1x8x8xbf16> to vector<8x8xbf16>
    %cst = arith.constant 3.535160e-01 : bf16
    %4 = vector.broadcast %cst : bf16 to vector<8x8xbf16>
    %5 = arith.mulf %3, %4 : vector<8x8xbf16>
    %c0_5 = arith.constant 0 : index
    %c0_6 = arith.constant 0 : index
    %c32 = arith.constant 32 : index
    %6 = vector.load %arg1[%c0_5, %c0_6, %c32] : memref<1x8x96xbf16, #tpu.memory_space<vmem>>, vector<1x8x8xbf16>
    %7 = vector.shape_cast %6 : vector<1x8x8xbf16> to vector<8x8xbf16>
    %c0_7 = arith.constant 0 : index
    %c0_8 = arith.constant 0 : index
    %c64 = arith.constant 64 : index
    %8 = vector.load %arg1[%c0_7, %c0_8, %c64] : memref<1x8x96xbf16, #tpu.memory_space<vmem>>, vector<1x8x8xbf16>
    %9 = vector.shape_cast %8 : vector<1x8x8xbf16> to vector<8x8xbf16>
    %cst_9 = arith.constant dense<0.000000e+00> : vector<8x8xf32>
    %10 = tpu.matmul %5, %7, %cst_9 {dimension_numbers = #tpu.dot_dimension_numbers<[1], [1], [0], [0], [0, 0, 1, 0], [], []>} : vector<8x8xbf16>, vector<8x8xbf16>, vector<8x8xf32> -> vector<8x8xf32>
    %11 = vector.broadcast %1 : vector<1x8xf32> to vector<8x8xf32>
    %12 = arith.addf %10, %11 : vector<8x8xf32>
    %cst_10 = arith.constant dense<0xFF800000> : vector<8xf32>
    %13 = vector.multi_reduction <maximumf>, %12, %cst_10 [1] : vector<8x8xf32> to vector<8xf32>
    %14 = vector.shape_cast %13 : vector<8xf32> to vector<8x1xf32>
    %15 = vector.broadcast %14 : vector<8x1xf32> to vector<8x8xf32>
    %16 = arith.subf %12, %15 : vector<8x8xf32>
    %17 = math.exp %16 : vector<8x8xf32>
    %cst_11 = arith.constant dense<0.000000e+00> : vector<8xf32>
    %18 = vector.multi_reduction <add>, %17, %cst_11 [1] : vector<8x8xf32> to vector<8xf32>
    %19 = vector.shape_cast %18 : vector<8xf32> to vector<8x1xf32>
    %20 = tpu.reciprocal %19 : vector<8x1xf32> -> vector<8x1xf32>
    %21 = vector.broadcast %20 : vector<8x1xf32> to vector<8x8xf32>
    %22 = arith.mulf %17, %21 : vector<8x8xf32>
    %23 = arith.truncf %22 : vector<8x8xf32> to vector<8x8xbf16>
    %c0_12 = arith.constant 0 : index
    %c0_13 = arith.constant 0 : index
    %c0_14 = arith.constant 0 : index
    %c0_15 = arith.constant 0 : index
    %24 = vector.load %arg3[%c0_12, %c0_13, %c0_14, %c0_15] : memref<1x4x8x8xbf16, #tpu.memory_space<vmem>>, vector<1x1x8x8xbf16>
    %25 = vector.shape_cast %24 : vector<1x1x8x8xbf16> to vector<8x8xbf16>
    %26 = vector.shape_cast %23 : vector<8x8xbf16> to vector<1x1x8x8xbf16>
    tpu.vector_store %arg3[%c0_12, %c0_13, %c0_14, %c0_15], %26 {strides = array<i32>} : memref<1x4x8x8xbf16, #tpu.memory_space<vmem>>, vector<1x1x8x8xbf16>,
    %27 = arith.truncf %22 : vector<8x8xf32> to vector<8x8xbf16>
    %cst_16 = arith.constant dense<0.000000e+00> : vector<8x8xf32>
    %28 = tpu.matmul %27, %9, %cst_16 {dimension_numbers = #tpu.dot_dimension_numbers<[1], [0], [0], [1], [0, 0, 1, 1], [], []>} : vector<8x8xbf16>, vector<8x8xbf16>, vector<8x8xf32> -> vector<8x8xf32>
    %29 = arith.truncf %28 : vector<8x8xf32> to vector<8x8xbf16>
    %c0_17 = arith.constant 0 : index
    %c0_18 = arith.constant 0 : index
    %c0_19 = arith.constant 0 : index
    %30 = vector.load %arg4[%c0_17, %c0_18, %c0_19] : memref<1x8x32xbf16, #tpu.memory_space<vmem>>, vector<1x8x8xbf16>
    %31 = vector.shape_cast %30 : vector<1x8x8xbf16> to vector<8x8xbf16>
    %32 = vector.shape_cast %29 : vector<8x8xbf16> to vector<1x8x8xbf16>
    tpu.vector_store %arg4[%c0_17, %c0_18, %c0_19], %32 {strides = array<i32>} : memref<1x8x32xbf16, #tpu.memory_space<vmem>>, vector<1x8x8xbf16>,
    %c0_20 = arith.constant 0 : index
    %c0_21 = arith.constant 0 : index
    %c8 = arith.constant 8 : index
    %33 = vector.load %arg1[%c0_20, %c0_21, %c8] : memref<1x8x96xbf16, #tpu.memory_space<vmem>>, vector<1x8x8xbf16>
    %34 = vector.shape_cast %33 : vector<1x8x8xbf16> to vector<8x8xbf16>
    %cst_22 = arith.constant 3.535160e-01 : bf16
    %35 = vector.broadcast %cst_22 : bf16 to vector<8x8xbf16>
    %36 = arith.mulf %34, %35 : vector<8x8xbf16>
    %c0_23 = arith.constant 0 : index
    %c0_24 = arith.constant 0 : index
    %c40 = arith.constant 40 : index
    %37 = vector.load %arg1[%c0_23, %c0_24, %c40] : memref<1x8x96xbf16, #tpu.memory_space<vmem>>, vector<1x8x8xbf16>
    %38 = vector.shape_cast %37 : vector<1x8x8xbf16> to vector<8x8xbf16>
    %c0_25 = arith.constant 0 : index
    %c0_26 = arith.constant 0 : index
    %c72 = arith.constant 72 : index
    %39 = vector.load %arg1[%c0_25, %c0_26, %c72] : memref<1x8x96xbf16, #tpu.memory_space<vmem>>, vector<1x8x8xbf16>
    %40 = vector.shape_cast %39 : vector<1x8x8xbf16> to vector<8x8xbf16>
    %cst_27 = arith.constant dense<0.000000e+00> : vector<8x8xf32>
    %41 = tpu.matmul %36, %38, %cst_27 {dimension_numbers = #tpu.dot_dimension_numbers<[1], [1], [0], [0], [0, 0, 1, 0], [], []>} : vector<8x8xbf16>, vector<8x8xbf16>, vector<8x8xf32> -> vector<8x8xf32>
    %42 = vector.broadcast %1 : vector<1x8xf32> to vector<8x8xf32>
    %43 = arith.addf %41, %42 : vector<8x8xf32>
    %cst_28 = arith.constant dense<0xFF800000> : vector<8xf32>
    %44 = vector.multi_reduction <maximumf>, %43, %cst_28 [1] : vector<8x8xf32> to vector<8xf32>
    %45 = vector.shape_cast %44 : vector<8xf32> to vector<8x1xf32>
    %46 = vector.broadcast %45 : vector<8x1xf32> to vector<8x8xf32>
    %47 = arith.subf %43, %46 : vector<8x8xf32>
    %48 = math.exp %47 : vector<8x8xf32>
    %cst_29 = arith.constant dense<0.000000e+00> : vector<8xf32>
    %49 = vector.multi_reduction <add>, %48, %cst_29 [1] : vector<8x8xf32> to vector<8xf32>
    %50 = vector.shape_cast %49 : vector<8xf32> to vector<8x1xf32>
    %51 = tpu.reciprocal %50 : vector<8x1xf32> -> vector<8x1xf32>
    %52 = vector.broadcast %51 : vector<8x1xf32> to vector<8x8xf32>
    %53 = arith.mulf %48, %52 : vector<8x8xf32>
    %54 = arith.truncf %53 : vector<8x8xf32> to vector<8x8xbf16>
    %c0_30 = arith.constant 0 : index
    %c1 = arith.constant 1 : index
    %c0_31 = arith.constant 0 : index
    %c0_32 = arith.constant 0 : index
    %55 = vector.load %arg3[%c0_30, %c1, %c0_31, %c0_32] : memref<1x4x8x8xbf16, #tpu.memory_space<vmem>>, vector<1x1x8x8xbf16>
    %56 = vector.shape_cast %55 : vector<1x1x8x8xbf16> to vector<8x8xbf16>
    %57 = vector.shape_cast %54 : vector<8x8xbf16> to vector<1x1x8x8xbf16>
    tpu.vector_store %arg3[%c0_30, %c1, %c0_31, %c0_32], %57 {strides = array<i32>} : memref<1x4x8x8xbf16, #tpu.memory_space<vmem>>, vector<1x1x8x8xbf16>,
    %58 = arith.truncf %53 : vector<8x8xf32> to vector<8x8xbf16>
    %cst_33 = arith.constant dense<0.000000e+00> : vector<8x8xf32>
    %59 = tpu.matmul %58, %40, %cst_33 {dimension_numbers = #tpu.dot_dimension_numbers<[1], [0], [0], [1], [0, 0, 1, 1], [], []>} : vector<8x8xbf16>, vector<8x8xbf16>, vector<8x8xf32> -> vector<8x8xf32>
    %60 = arith.truncf %59 : vector<8x8xf32> to vector<8x8xbf16>
    %c0_34 = arith.constant 0 : index
    %c0_35 = arith.constant 0 : index
    %c8_36 = arith.constant 8 : index
    %61 = vector.load %arg4[%c0_34, %c0_35, %c8_36] : memref<1x8x32xbf16, #tpu.memory_space<vmem>>, vector<1x8x8xbf16>
    %62 = vector.shape_cast %61 : vector<1x8x8xbf16> to vector<8x8xbf16>
    %63 = vector.shape_cast %60 : vector<8x8xbf16> to vector<1x8x8xbf16>
    tpu.vector_store %arg4[%c0_34, %c0_35, %c8_36], %63 {strides = array<i32>} : memref<1x8x32xbf16, #tpu.memory_space<vmem>>, vector<1x8x8xbf16>,
    %c0_37 = arith.constant 0 : index
    %c0_38 = arith.constant 0 : index
    %c16 = arith.constant 16 : index
    %64 = vector.load %arg1[%c0_37, %c0_38, %c16] : memref<1x8x96xbf16, #tpu.memory_space<vmem>>, vector<1x8x8xbf16>
    %65 = vector.shape_cast %64 : vector<1x8x8xbf16> to vector<8x8xbf16>
    %cst_39 = arith.constant 3.535160e-01 : bf16
    %66 = vector.broadcast %cst_39 : bf16 to vector<8x8xbf16>
    %67 = arith.mulf %65, %66 : vector<8x8xbf16>
    %c0_40 = arith.constant 0 : index
    %c0_41 = arith.constant 0 : index
    %c48 = arith.constant 48 : index
    %68 = vector.load %arg1[%c0_40, %c0_41, %c48] : memref<1x8x96xbf16, #tpu.memory_space<vmem>>, vector<1x8x8xbf16>
    %69 = vector.shape_cast %68 : vector<1x8x8xbf16> to vector<8x8xbf16>
    %c0_42 = arith.constant 0 : index
    %c0_43 = arith.constant 0 : index
    %c80 = arith.constant 80 : index
    %70 = vector.load %arg1[%c0_42, %c0_43, %c80] : memref<1x8x96xbf16, #tpu.memory_space<vmem>>, vector<1x8x8xbf16>
    %71 = vector.shape_cast %70 : vector<1x8x8xbf16> to vector<8x8xbf16>
    %cst_44 = arith.constant dense<0.000000e+00> : vector<8x8xf32>
    %72 = tpu.matmul %67, %69, %cst_44 {dimension_numbers = #tpu.dot_dimension_numbers<[1], [1], [0], [0], [0, 0, 1, 0], [], []>} : vector<8x8xbf16>, vector<8x8xbf16>, vector<8x8xf32> -> vector<8x8xf32>
    %73 = vector.broadcast %1 : vector<1x8xf32> to vector<8x8xf32>
    %74 = arith.addf %72, %73 : vector<8x8xf32>
    %cst_45 = arith.constant dense<0xFF800000> : vector<8xf32>
    %75 = vector.multi_reduction <maximumf>, %74, %cst_45 [1] : vector<8x8xf32> to vector<8xf32>
    %76 = vector.shape_cast %75 : vector<8xf32> to vector<8x1xf32>
    %77 = vector.broadcast %76 : vector<8x1xf32> to vector<8x8xf32>
    %78 = arith.subf %74, %77 : vector<8x8xf32>
    %79 = math.exp %78 : vector<8x8xf32>
    %cst_46 = arith.constant dense<0.000000e+00> : vector<8xf32>
    %80 = vector.multi_reduction <add>, %79, %cst_46 [1] : vector<8x8xf32> to vector<8xf32>
    %81 = vector.shape_cast %80 : vector<8xf32> to vector<8x1xf32>
    %82 = tpu.reciprocal %81 : vector<8x1xf32> -> vector<8x1xf32>
    %83 = vector.broadcast %82 : vector<8x1xf32> to vector<8x8xf32>
    %84 = arith.mulf %79, %83 : vector<8x8xf32>
    %85 = arith.truncf %84 : vector<8x8xf32> to vector<8x8xbf16>
    %c0_47 = arith.constant 0 : index
    %c2 = arith.constant 2 : index
    %c0_48 = arith.constant 0 : index
    %c0_49 = arith.constant 0 : index
    %86 = vector.load %arg3[%c0_47, %c2, %c0_48, %c0_49] : memref<1x4x8x8xbf16, #tpu.memory_space<vmem>>, vector<1x1x8x8xbf16>
    %87 = vector.shape_cast %86 : vector<1x1x8x8xbf16> to vector<8x8xbf16>
    %88 = vector.shape_cast %85 : vector<8x8xbf16> to vector<1x1x8x8xbf16>
    tpu.vector_store %arg3[%c0_47, %c2, %c0_48, %c0_49], %88 {strides = array<i32>} : memref<1x4x8x8xbf16, #tpu.memory_space<vmem>>, vector<1x1x8x8xbf16>,
    %89 = arith.truncf %84 : vector<8x8xf32> to vector<8x8xbf16>
    %cst_50 = arith.constant dense<0.000000e+00> : vector<8x8xf32>
    %90 = tpu.matmul %89, %71, %cst_50 {dimension_numbers = #tpu.dot_dimension_numbers<[1], [0], [0], [1], [0, 0, 1, 1], [], []>} : vector<8x8xbf16>, vector<8x8xbf16>, vector<8x8xf32> -> vector<8x8xf32>
    %91 = arith.truncf %90 : vector<8x8xf32> to vector<8x8xbf16>
    %c0_51 = arith.constant 0 : index
    %c0_52 = arith.constant 0 : index
    %c16_53 = arith.constant 16 : index
    %92 = vector.load %arg4[%c0_51, %c0_52, %c16_53] : memref<1x8x32xbf16, #tpu.memory_space<vmem>>, vector<1x8x8xbf16>
    %93 = vector.shape_cast %92 : vector<1x8x8xbf16> to vector<8x8xbf16>
    %94 = vector.shape_cast %91 : vector<8x8xbf16> to vector<1x8x8xbf16>
    tpu.vector_store %arg4[%c0_51, %c0_52, %c16_53], %94 {strides = array<i32>} : memref<1x8x32xbf16, #tpu.memory_space<vmem>>, vector<1x8x8xbf16>,
    %c0_54 = arith.constant 0 : index
    %c0_55 = arith.constant 0 : index
    %c24 = arith.constant 24 : index
    %95 = vector.load %arg1[%c0_54, %c0_55, %c24] : memref<1x8x96xbf16, #tpu.memory_space<vmem>>, vector<1x8x8xbf16>
    %96 = vector.shape_cast %95 : vector<1x8x8xbf16> to vector<8x8xbf16>
    %cst_56 = arith.constant 3.535160e-01 : bf16
    %97 = vector.broadcast %cst_56 : bf16 to vector<8x8xbf16>
    %98 = arith.mulf %96, %97 : vector<8x8xbf16>
    %c0_57 = arith.constant 0 : index
    %c0_58 = arith.constant 0 : index
    %c56 = arith.constant 56 : index
    %99 = vector.load %arg1[%c0_57, %c0_58, %c56] : memref<1x8x96xbf16, #tpu.memory_space<vmem>>, vector<1x8x8xbf16>
    %100 = vector.shape_cast %99 : vector<1x8x8xbf16> to vector<8x8xbf16>
    %c0_59 = arith.constant 0 : index
    %c0_60 = arith.constant 0 : index
    %c88 = arith.constant 88 : index
    %101 = vector.load %arg1[%c0_59, %c0_60, %c88] : memref<1x8x96xbf16, #tpu.memory_space<vmem>>, vector<1x8x8xbf16>
    %102 = vector.shape_cast %101 : vector<1x8x8xbf16> to vector<8x8xbf16>
    %cst_61 = arith.constant dense<0.000000e+00> : vector<8x8xf32>
    %103 = tpu.matmul %98, %100, %cst_61 {dimension_numbers = #tpu.dot_dimension_numbers<[1], [1], [0], [0], [0, 0, 1, 0], [], []>} : vector<8x8xbf16>, vector<8x8xbf16>, vector<8x8xf32> -> vector<8x8xf32>
    %104 = vector.broadcast %1 : vector<1x8xf32> to vector<8x8xf32>
    %105 = arith.addf %103, %104 : vector<8x8xf32>
    %cst_62 = arith.constant dense<0xFF800000> : vector<8xf32>
    %106 = vector.multi_reduction <maximumf>, %105, %cst_62 [1] : vector<8x8xf32> to vector<8xf32>
    %107 = vector.shape_cast %106 : vector<8xf32> to vector<8x1xf32>
    %108 = vector.broadcast %107 : vector<8x1xf32> to vector<8x8xf32>
    %109 = arith.subf %105, %108 : vector<8x8xf32>
    %110 = math.exp %109 : vector<8x8xf32>
    %cst_63 = arith.constant dense<0.000000e+00> : vector<8xf32>
    %111 = vector.multi_reduction <add>, %110, %cst_63 [1] : vector<8x8xf32> to vector<8xf32>
    %112 = vector.shape_cast %111 : vector<8xf32> to vector<8x1xf32>
    %113 = tpu.reciprocal %112 : vector<8x1xf32> -> vector<8x1xf32>
    %114 = vector.broadcast %113 : vector<8x1xf32> to vector<8x8xf32>
    %115 = arith.mulf %110, %114 : vector<8x8xf32>
    %116 = arith.truncf %115 : vector<8x8xf32> to vector<8x8xbf16>
    %c0_64 = arith.constant 0 : index
    %c3 = arith.constant 3 : index
    %c0_65 = arith.constant 0 : index
    %c0_66 = arith.constant 0 : index
    %117 = vector.load %arg3[%c0_64, %c3, %c0_65, %c0_66] : memref<1x4x8x8xbf16, #tpu.memory_space<vmem>>, vector<1x1x8x8xbf16>
    %118 = vector.shape_cast %117 : vector<1x1x8x8xbf16> to vector<8x8xbf16>
    %119 = vector.shape_cast %116 : vector<8x8xbf16> to vector<1x1x8x8xbf16>
    tpu.vector_store %arg3[%c0_64, %c3, %c0_65, %c0_66], %119 {strides = array<i32>} : memref<1x4x8x8xbf16, #tpu.memory_space<vmem>>, vector<1x1x8x8xbf16>,
    %120 = arith.truncf %115 : vector<8x8xf32> to vector<8x8xbf16>
    %cst_67 = arith.constant dense<0.000000e+00> : vector<8x8xf32>
    %121 = tpu.matmul %120, %102, %cst_67 {dimension_numbers = #tpu.dot_dimension_numbers<[1], [0], [0], [1], [0, 0, 1, 1], [], []>} : vector<8x8xbf16>, vector<8x8xbf16>, vector<8x8xf32> -> vector<8x8xf32>
    %122 = arith.truncf %121 : vector<8x8xf32> to vector<8x8xbf16>
    %c0_68 = arith.constant 0 : index
    %c0_69 = arith.constant 0 : index
    %c24_70 = arith.constant 24 : index
    %123 = vector.load %arg4[%c0_68, %c0_69, %c24_70] : memref<1x8x32xbf16, #tpu.memory_space<vmem>>, vector<1x8x8xbf16>
    %124 = vector.shape_cast %123 : vector<1x8x8xbf16> to vector<8x8xbf16>
    %125 = vector.shape_cast %122 : vector<8x8xbf16> to vector<1x8x8xbf16>
    tpu.vector_store %arg4[%c0_68, %c0_69, %c24_70], %125 {strides = array<i32>} : memref<1x8x32xbf16, #tpu.memory_space<vmem>>, vector<1x8x8xbf16>,
    return
  }
  func.func @transform_0(%arg0: i32) -> (i32, i32, i32) {
    %c0_i32 = arith.constant 0 : i32
    %c0_i32_0 = arith.constant 0 : i32
    %c0_i32_1 = arith.constant 0 : i32
    return %arg0, %c0_i32, %c0_i32_0 : i32, i32, i32
  }
  func.func @transform_1(%arg0: i32) -> (i32, i32, i32) {
    %c0_i32 = arith.constant 0 : i32
    %c0_i32_0 = arith.constant 0 : i32
    %c0_i32_1 = arith.constant 0 : i32
    return %arg0, %c0_i32, %c0_i32_0 : i32, i32, i32
  }
  func.func @transform_2(%arg0: i32) -> (i32, i32, i32, i32) {
    %c0_i32 = arith.constant 0 : i32
    %c0_i32_0 = arith.constant 0 : i32
    %c0_i32_1 = arith.constant 0 : i32
    %c0_i32_2 = arith.constant 0 : i32
    return %arg0, %c0_i32, %c0_i32_0, %c0_i32_1 : i32, i32, i32, i32
  }
  func.func @transform_3(%arg0: i32) -> (i32, i32, i32) {
    %c0_i32 = arith.constant 0 : i32
    %c0_i32_0 = arith.constant 0 : i32
    %c0_i32_1 = arith.constant 0 : i32
    return %arg0, %c0_i32, %c0_i32_0 : i32, i32, i32
  }
}

module attributes {stable_mosaic.version = 11 : i64} {
  func.func @_layernorm_kernel(%arg0: i32, %arg1: memref<16x32xbf16, #tpu.memory_space<vmem>>, %arg2: memref<16x32xbf16, #tpu.memory_space<vmem>>, %arg3: memref<1x32xf32, #tpu.memory_space<vmem>>, %arg4: memref<1x32xf32, #tpu.memory_space<vmem>>, %arg5: memref<16x32xbf16, #tpu.memory_space<vmem>>) attributes {dimension_semantics = [#tpu.dimension_semantics<parallel>], iteration_bounds = array<i64: 1>, scalar_prefetch = 0 : i64, scratch_operands = 0 : i64, tpu.core_type = #tpu.core_type<tc>, window_params = [{transform_indices = @transform_0, window_bounds = array<i64: 16, 32>}, {transform_indices = @transform_1, window_bounds = array<i64: 16, 32>}, {pipeline_mode = #tpu.pipeline_mode<synchronous>, transform_indices = @transform_2, window_bounds = array<i64: 1, 32>}, {pipeline_mode = #tpu.pipeline_mode<synchronous>, transform_indices = @transform_3, window_bounds = array<i64: 1, 32>}, {transform_indices = @transform_4, window_bounds = array<i64: 16, 32>}]} {
    %c0 = arith.constant 0 : index
    %c0_0 = arith.constant 0 : index
    %0 = vector.load %arg1[%c0, %c0_0] : memref<16x32xbf16, #tpu.memory_space<vmem>>, vector<16x32xbf16>
    %1 = arith.extf %0 : vector<16x32xbf16> to vector<16x32xf32>
    %c0_1 = arith.constant 0 : index
    %c0_2 = arith.constant 0 : index
    %2 = vector.load %arg2[%c0_1, %c0_2] : memref<16x32xbf16, #tpu.memory_space<vmem>>, vector<16x32xbf16>
    %3 = arith.extf %2 : vector<16x32xbf16> to vector<16x32xf32>
    %4 = arith.addf %1, %3 : vector<16x32xf32>
    %cst = arith.constant dense<0.000000e+00> : vector<16xf32>
    %5 = vector.multi_reduction <add>, %4, %cst [1] : vector<16x32xf32> to vector<16xf32>
    %6 = vector.shape_cast %5 : vector<16xf32> to vector<16x1xf32>
    %cst_3 = arith.constant 3.200000e+01 : f32
    %7 = vector.broadcast %cst_3 : f32 to vector<16x1xf32>
    %8 = arith.divf %6, %7 : vector<16x1xf32>
    %9 = vector.broadcast %8 : vector<16x1xf32> to vector<16x32xf32>
    %10 = arith.subf %4, %9 : vector<16x32xf32>
    %11 = arith.mulf %10, %10 : vector<16x32xf32>
    %cst_4 = arith.constant dense<0.000000e+00> : vector<16xf32>
    %12 = vector.multi_reduction <add>, %11, %cst_4 [1] : vector<16x32xf32> to vector<16xf32>
    %13 = vector.shape_cast %12 : vector<16xf32> to vector<16x1xf32>
    %cst_5 = arith.constant 3.200000e+01 : f32
    %14 = vector.broadcast %cst_5 : f32 to vector<16x1xf32>
    %15 = arith.divf %13, %14 : vector<16x1xf32>
    %16 = vector.broadcast %8 : vector<16x1xf32> to vector<16x32xf32>
    %17 = arith.subf %4, %16 : vector<16x32xf32>
    %cst_6 = arith.constant 9.99999996E-13 : f32
    %18 = vector.broadcast %cst_6 : f32 to vector<16x1xf32>
    %19 = arith.addf %15, %18 : vector<16x1xf32>
    %20 = math.rsqrt %19 : vector<16x1xf32>
    %21 = vector.broadcast %20 : vector<16x1xf32> to vector<16x32xf32>
    %22 = arith.mulf %17, %21 : vector<16x32xf32>
    %c0_7 = arith.constant 0 : index
    %c0_8 = arith.constant 0 : index
    %23 = vector.load %arg3[%c0_7, %c0_8] : memref<1x32xf32, #tpu.memory_space<vmem>>, vector<1x32xf32>
    %24 = vector.broadcast %23 : vector<1x32xf32> to vector<16x32xf32>
    %25 = arith.mulf %22, %24 : vector<16x32xf32>
    %c0_9 = arith.constant 0 : index
    %c0_10 = arith.constant 0 : index
    %26 = vector.load %arg4[%c0_9, %c0_10] : memref<1x32xf32, #tpu.memory_space<vmem>>, vector<1x32xf32>
    %27 = vector.broadcast %26 : vector<1x32xf32> to vector<16x32xf32>
    %28 = arith.addf %25, %27 : vector<16x32xf32>
    %29 = arith.truncf %28 : vector<16x32xf32> to vector<16x32xbf16>
    %c0_11 = arith.constant 0 : index
    %c0_12 = arith.constant 0 : index
    %30 = vector.load %arg5[%c0_11, %c0_12] : memref<16x32xbf16, #tpu.memory_space<vmem>>, vector<16x32xbf16>
    tpu.vector_store %arg5[%c0_11, %c0_12], %29 {strides = array<i32>} : memref<16x32xbf16, #tpu.memory_space<vmem>>, vector<16x32xbf16>,
    return
  }
  func.func @transform_0(%arg0: i32) -> (i32, i32) {
    %c0_i32 = arith.constant 0 : i32
    %c0_i32_0 = arith.constant 0 : i32
    return %arg0, %c0_i32 : i32, i32
  }
  func.func @transform_1(%arg0: i32) -> (i32, i32) {
    %c0_i32 = arith.constant 0 : i32
    %c0_i32_0 = arith.constant 0 : i32
    return %arg0, %c0_i32 : i32, i32
  }
  func.func @transform_2(%arg0: i32) -> (i32, i32) {
    %c0_i32 = arith.constant 0 : i32
    %c0_i32_0 = arith.constant 0 : i32
    %c0_i32_1 = arith.constant 0 : i32
    return %c0_i32, %c0_i32_0 : i32, i32
  }
  func.func @transform_3(%arg0: i32) -> (i32, i32) {
    %c0_i32 = arith.constant 0 : i32
    %c0_i32_0 = arith.constant 0 : i32
    %c0_i32_1 = arith.constant 0 : i32
    return %c0_i32, %c0_i32_0 : i32, i32
  }
  func.func @transform_4(%arg0: i32) -> (i32, i32) {
    %c0_i32 = arith.constant 0 : i32
    %c0_i32_0 = arith.constant 0 : i32
    return %arg0, %c0_i32 : i32, i32
  }
}

module attributes {stable_mosaic.version = 11 : i64} {
  func.func @_linear_fullk_kernel(%arg0: i32, %arg1: i32, %arg2: memref<16x32xbf16, #tpu.memory_space<vmem>>, %arg3: memref<32x64xbf16, #tpu.memory_space<vmem>>, %arg4: memref<1x64xf32, #tpu.memory_space<vmem>>, %arg5: memref<16x64xbf16, #tpu.memory_space<vmem>>) attributes {dimension_semantics = [#tpu.dimension_semantics<parallel>, #tpu.dimension_semantics<parallel>], iteration_bounds = array<i64: 1, 1>, scalar_prefetch = 0 : i64, scratch_operands = 0 : i64, tpu.core_type = #tpu.core_type<tc>, window_params = [{transform_indices = @transform_0, window_bounds = array<i64: 16, 32>}, {transform_indices = @transform_1, window_bounds = array<i64: 32, 64>}, {transform_indices = @transform_2, window_bounds = array<i64: 1, 64>}, {transform_indices = @transform_3, window_bounds = array<i64: 16, 64>}]} {
    %c0 = arith.constant 0 : index
    %c0_0 = arith.constant 0 : index
    %0 = vector.load %arg2[%c0, %c0_0] : memref<16x32xbf16, #tpu.memory_space<vmem>>, vector<16x32xbf16>
    %c0_1 = arith.constant 0 : index
    %c0_2 = arith.constant 0 : index
    %1 = vector.load %arg3[%c0_1, %c0_2] : memref<32x64xbf16, #tpu.memory_space<vmem>>, vector<32x64xbf16>
    %cst = arith.constant dense<0.000000e+00> : vector<16x64xf32>
    %2 = tpu.matmul %0, %1, %cst {dimension_numbers = #tpu.dot_dimension_numbers<[1], [0], [0], [1], [0, 0, 1, 1], [], []>} : vector<16x32xbf16>, vector<32x64xbf16>, vector<16x64xf32> -> vector<16x64xf32>
    %c0_3 = arith.constant 0 : index
    %c0_4 = arith.constant 0 : index
    %3 = vector.load %arg4[%c0_3, %c0_4] : memref<1x64xf32, #tpu.memory_space<vmem>>, vector<1x64xf32>
    %4 = vector.broadcast %3 : vector<1x64xf32> to vector<16x64xf32>
    %5 = arith.addf %2, %4 : vector<16x64xf32>
    %6 = arith.mulf %5, %5 : vector<16x64xf32>
    %7 = arith.mulf %5, %6 : vector<16x64xf32>
    %cst_5 = arith.constant 4.471500e-02 : f32
    %8 = vector.broadcast %cst_5 : f32 to vector<16x64xf32>
    %9 = arith.mulf %8, %7 : vector<16x64xf32>
    %10 = arith.addf %5, %9 : vector<16x64xf32>
    %cst_6 = arith.constant 0.797884583 : f32
    %11 = vector.broadcast %cst_6 : f32 to vector<16x64xf32>
    %12 = arith.mulf %11, %10 : vector<16x64xf32>
    %13 = math.tanh %12 : vector<16x64xf32>
    %cst_7 = arith.constant 1.000000e+00 : f32
    %14 = vector.broadcast %cst_7 : f32 to vector<16x64xf32>
    %15 = arith.addf %14, %13 : vector<16x64xf32>
    %cst_8 = arith.constant 5.000000e-01 : f32
    %16 = vector.broadcast %cst_8 : f32 to vector<16x64xf32>
    %17 = arith.mulf %16, %15 : vector<16x64xf32>
    %18 = arith.mulf %5, %17 : vector<16x64xf32>
    %19 = arith.truncf %18 : vector<16x64xf32> to vector<16x64xbf16>
    %c0_9 = arith.constant 0 : index
    %c0_10 = arith.constant 0 : index
    %20 = vector.load %arg5[%c0_9, %c0_10] : memref<16x64xbf16, #tpu.memory_space<vmem>>, vector<16x64xbf16>
    tpu.vector_store %arg5[%c0_9, %c0_10], %19 {strides = array<i32>} : memref<16x64xbf16, #tpu.memory_space<vmem>>, vector<16x64xbf16>,
    return
  }
  func.func @transform_0(%arg0: i32, %arg1: i32) -> (i32, i32) {
    %c0_i32 = arith.constant 0 : i32
    %c0_i32_0 = arith.constant 0 : i32
    return %arg0, %c0_i32 : i32, i32
  }
  func.func @transform_1(%arg0: i32, %arg1: i32) -> (i32, i32) {
    %c0_i32 = arith.constant 0 : i32
    %c0_i32_0 = arith.constant 0 : i32
    return %c0_i32, %arg1 : i32, i32
  }
  func.func @transform_2(%arg0: i32, %arg1: i32) -> (i32, i32) {
    %c0_i32 = arith.constant 0 : i32
    %c0_i32_0 = arith.constant 0 : i32
    return %c0_i32, %arg1 : i32, i32
  }
  func.func @transform_3(%arg0: i32, %arg1: i32) -> (i32, i32) {
    %c0_i32 = arith.constant 0 : i32
    return %arg0, %arg1 : i32, i32
  }
}

module attributes {stable_mosaic.version = 11 : i64} {
  func.func @_linear_fullk_kernel(%arg0: i32, %arg1: i32, %arg2: memref<16x64xbf16, #tpu.memory_space<vmem>>, %arg3: memref<64x32xbf16, #tpu.memory_space<vmem>>, %arg4: memref<1x32xf32, #tpu.memory_space<vmem>>, %arg5: memref<16x32xbf16, #tpu.memory_space<vmem>>) attributes {dimension_semantics = [#tpu.dimension_semantics<parallel>, #tpu.dimension_semantics<parallel>], iteration_bounds = array<i64: 1, 1>, scalar_prefetch = 0 : i64, scratch_operands = 0 : i64, tpu.core_type = #tpu.core_type<tc>, window_params = [{transform_indices = @transform_0, window_bounds = array<i64: 16, 64>}, {transform_indices = @transform_1, window_bounds = array<i64: 64, 32>}, {transform_indices = @transform_2, window_bounds = array<i64: 1, 32>}, {transform_indices = @transform_3, window_bounds = array<i64: 16, 32>}]} {
    %c0 = arith.constant 0 : index
    %c0_0 = arith.constant 0 : index
    %0 = vector.load %arg2[%c0, %c0_0] : memref<16x64xbf16, #tpu.memory_space<vmem>>, vector<16x64xbf16>
    %c0_1 = arith.constant 0 : index
    %c0_2 = arith.constant 0 : index
    %1 = vector.load %arg3[%c0_1, %c0_2] : memref<64x32xbf16, #tpu.memory_space<vmem>>, vector<64x32xbf16>
    %cst = arith.constant dense<0.000000e+00> : vector<16x32xf32>
    %2 = tpu.matmul %0, %1, %cst {dimension_numbers = #tpu.dot_dimension_numbers<[1], [0], [0], [1], [0, 0, 1, 1], [], []>} : vector<16x64xbf16>, vector<64x32xbf16>, vector<16x32xf32> -> vector<16x32xf32>
    %c0_3 = arith.constant 0 : index
    %c0_4 = arith.constant 0 : index
    %3 = vector.load %arg4[%c0_3, %c0_4] : memref<1x32xf32, #tpu.memory_space<vmem>>, vector<1x32xf32>
    %4 = vector.broadcast %3 : vector<1x32xf32> to vector<16x32xf32>
    %5 = arith.addf %2, %4 : vector<16x32xf32>
    %6 = arith.truncf %5 : vector<16x32xf32> to vector<16x32xbf16>
    %c0_5 = arith.constant 0 : index
    %c0_6 = arith.constant 0 : index
    %7 = vector.load %arg5[%c0_5, %c0_6] : memref<16x32xbf16, #tpu.memory_space<vmem>>, vector<16x32xbf16>
    tpu.vector_store %arg5[%c0_5, %c0_6], %6 {strides = array<i32>} : memref<16x32xbf16, #tpu.memory_space<vmem>>, vector<16x32xbf16>,
    return
  }
  func.func @transform_0(%arg0: i32, %arg1: i32) -> (i32, i32) {
    %c0_i32 = arith.constant 0 : i32
    %c0_i32_0 = arith.constant 0 : i32
    return %arg0, %c0_i32 : i32, i32
  }
  func.func @transform_1(%arg0: i32, %arg1: i32) -> (i32, i32) {
    %c0_i32 = arith.constant 0 : i32
    %c0_i32_0 = arith.constant 0 : i32
    return %c0_i32, %arg1 : i32, i32
  }
  func.func @transform_2(%arg0: i32, %arg1: i32) -> (i32, i32) {
    %c0_i32 = arith.constant 0 : i32
    %c0_i32_0 = arith.constant 0 : i32
    return %c0_i32, %arg1 : i32, i32
  }
  func.func @transform_3(%arg0: i32, %arg1: i32) -> (i32, i32) {
    %c0_i32 = arith.constant 0 : i32
    return %arg0, %arg1 : i32, i32
  }
}

</mosaic_0001>

<llo_original>
// kernel: transformer_forward.18
$region0: #{transformer_forward.18}
  #allocation0 [shape = 'u32[]', space=smem, size = 0x4, offset = 0x4, fixed_abs, tag = 'smem constant byte address 0x4 - core index']
  #allocation1 [shape = 'u32[144,128]{1,0:T(1,128)}', space=vmem, size = 0x12000, scoped, tag = 'internal scratch']
  %s0 = inlined_call_operand.hbm [shape: bf16[16,32], index: 0, kind: input, shape index: {}]
  %s1 = inlined_call_operand.hbm [shape: bf16[32,32], index: 1, kind: input, shape index: {}]
  %s2 = inlined_call_operand.hbm [shape: f32[1,32], index: 2, kind: input, shape index: {}]
  %s3 = inlined_call_operand.hbm [shape: bf16[16,32], index: 3, kind: output, shape index: {}]
  %s4 = sld [smem:[#allocation0]]
  $region34: #{transformer_forward.18} parent=0
    _
  %s6 = ssub.s32 1, %s4
  %s7 = scalar_select 0, %s6, %s4
  $region1: #{transformer_forward.18} parent=0
    #allocation2 [shape = 'u8[4096]{0}', space=vmem, size = 0x1000, scoped, tag = 'input window, operand 0, single buffered']
    #allocation3 [shape = 's32[1]{0}', space=sflag, size = 0x4, scoped, tag = 'scoped memory for transformer_forward.18']
    #allocation4 [shape = 's32[1]{0}', space=sflag, size = 0x4, scoped, tag = 'scoped memory for transformer_forward.18']
    #allocation5 [shape = 'u8[8192]{0}', space=vmem, size = 0x2000, scoped, tag = 'input window, operand 1, single buffered']
    #allocation6 [shape = 's32[1]{0}', space=sflag, size = 0x4, scoped, tag = 'scoped memory for transformer_forward.18']
    #allocation7 [shape = 'u8[512]{0}', space=vmem, size = 0x400, scoped, tag = 'input window, operand 2, single buffered']
    #allocation8 [shape = 'u8[4096]{0}', space=vmem, size = 0x1000, scoped, tag = 'output window, operand 0, single buffered']
    %8 = vsyncpa [#allocation3], 0
    %9 = vsyncpa [#allocation6], 0
    %10 = vsyncpa [#allocation4], 0
    // Predicated region
    $region2: #{transformer_forward.18} parent=1 // pred_check
      _
    $region3: #{transformer_forward.18} parent=1 // pred_check_branch
      %12 = sbr.rel (0) target = $region5
    $region4: #{transformer_forward.18} parent=1 // pred_region
      %s14 = ssub.s32 128, 128
      %15 = vsyncadd [#allocation3], %s14
      %s16 = sshll.u32 [#allocation2], 4
      %s17 = int_to_ptr.vmem [resolvable:$true] %s16
      %22 = dma.hbm_to_vmem [thread:$0]  %s0, 128, %s17, [#allocation3], 64, 64, 4
    $region5: #{transformer_forward.18} parent=1 // pred_fallthru
      _
    // Predicated region
    $region6: #{transformer_forward.18} parent=1 // pred_check
      _
    $region7: #{transformer_forward.18} parent=1 // pred_check_branch
      %24 = sbr.rel (0) target = $region9
    $region8: #{transformer_forward.18} parent=1 // pred_region
      %s26 = ssub.s32 256, 256
      %27 = vsyncadd [#allocation6], %s26
      %s28 = sshll.u32 [#allocation5], 4
      %s29 = int_to_ptr.vmem [resolvable:$true] %s28
      %34 = dma.hbm_to_vmem [thread:$0]  %s1, 256, %s29, [#allocation6], 64, 64, 4
    $region9: #{transformer_forward.18} parent=1 // pred_fallthru
      _
    // Predicated region
    $region10: #{transformer_forward.18} parent=1 // pred_check
      _
    $region11: #{transformer_forward.18} parent=1 // pred_check_branch
      %36 = sbr.rel (0) target = $region13
    $region12: #{transformer_forward.18} parent=1 // pred_region
      %s38 = ssub.s32 16, 16
      %39 = vsyncadd [#allocation6], %s38
      %s41 = sshll.u32 [#allocation7], 4
      %s42 = int_to_ptr.vmem [resolvable:$true] %s41
      %44 = dma.hbm_to_vmem [thread:$0]  %s2, 16, %s42, [#allocation6]
    $region13: #{transformer_forward.18} parent=1 // pred_fallthru
      _
    // Predicated region
    $region14: #{transformer_forward.18} parent=1 // pred_check
      _
    $region15: #{transformer_forward.18} parent=1 // pred_check_branch
      %46 = sbr.rel (0) target = $region17
    $region16: #{transformer_forward.18} parent=1 // pred_region
      %47 = dma.done [#allocation3], 128
    $region17: #{transformer_forward.18} parent=1 // pred_fallthru
      _
    // Predicated region
    $region18: #{transformer_forward.18} parent=1 // pred_check
      _
    $region19: #{transformer_forward.18} parent=1 // pred_check_branch
      %49 = sbr.rel (0) target = $region21
    $region20: #{transformer_forward.18} parent=1 // pred_region
      %50 = dma.done [#allocation6], 256
    $region21: #{transformer_forward.18} parent=1 // pred_fallthru
      _
    // Predicated region
    $region22: #{transformer_forward.18} parent=1 // pred_check
      _
    $region23: #{transformer_forward.18} parent=1 // pred_check_branch
      %52 = sbr.rel (0) target = $region25
    $region24: #{transformer_forward.18} parent=1 // pred_region
      %53 = dma.done [#allocation6], 16
    $region25: #{transformer_forward.18} parent=1 // pred_fallthru
      _
    %v55 = vld [vmem:[#allocation2] sm:$0xf]
    %v56 = vld [vmem:[#allocation2 + $0x4] sm:$0xf]
    %v57 = vld [vmem:[#allocation5] sm:$0xf]
    %v58 = vld [vmem:[#allocation5 + $0x4] sm:$0xf]
    %v59 = vld [vmem:[#allocation5 + $0x8] sm:$0xf]
    %v60 = vld [vmem:[#allocation5 + $0xc] sm:$0xf]
    %v61 = vld [vmem:[#allocation7] sm:$0x1]
    %v63 = vlaneseq
    %v64 = vshrl.u32 %v63, 7
    %v65 = vsub.s32 0, %v64
    %v66 = vrot.slane %v61, %v65
    %v70 = vunpack.c.l.b16 %v55
    %v71 = vunpack.c.l.b16 %v56
    %v72 = vpack.c.b16 %v71, %v70
    %v77 = vunpack.c.l.b16 %v57
    %v78 = vunpack.c.l.b16 %v58
    %v79 = vunpack.c.l.b16 %v59
    %v80 = vunpack.c.l.b16 %v60
    %v81 = vpack.c.b16 %v78, %v77
    %v82 = vpack.c.b16 %v80, %v79
    %vm85 = vcmask 261120
    %v87 = vsel %vm85, %v72, 0
    %89 = vmatprep.subr.bf16.mxu0 0
    %90 = vmatpush1.bf16.msra.mxu0 %v81
    %91 = vmatprep.subr.bf16.mxu0 0
    %92 = vmatpush1.bf16.msra.mxu0 %v82
    %93 = vmatprep.subr.bf16.mxu0 0
    %94 = vmatpush1.bf16.msra.mxu0 0
    %95 = vmatprep.subr.bf16.mxu0 0
    %96 = vmatpush1.bf16.msra.mxu0 0
    %97 = vmatprep.subr.bf16.mxu0 0
    %98 = vmatpush1.bf16.msra.mxu0 0
    %99 = vmatprep.subr.bf16.mxu0 0
    %100 = vmatpush1.bf16.msra.mxu0 0
    %101 = vmatprep.subr.bf16.mxu0 0
    %102 = vmatpush1.bf16.msra.mxu0 0
    %103 = vmatprep.subr.bf16.mxu0 0
    %104 = vmatpush1.bf16.msra.mxu0 0
    %105 = vmatprep.subr.bf16.mxu0 0
    %106 = vmatpush1.bf16.msra.mxu0 0
    %107 = vmatprep.subr.bf16.mxu0 0
    %108 = vmatpush1.bf16.msra.mxu0 0
    %109 = vmatprep.subr.bf16.mxu0 0
    %110 = vmatpush1.bf16.msra.mxu0 0
    %111 = vmatprep.subr.bf16.mxu0 0
    %112 = vmatpush1.bf16.msra.mxu0 0
    %113 = vmatprep.subr.bf16.mxu0 0
    %114 = vmatpush1.bf16.msra.mxu0 0
    %115 = vmatprep.subr.bf16.mxu0 0
    %116 = vmatpush1.bf16.msra.mxu0 0
    %117 = vmatprep.subr.bf16.mxu0 0
    %118 = vmatpush1.bf16.msra.mxu0 0
    %119 = vmatprep.subr.bf16.mxu0 0
    %120 = vmatpush1.bf16.msra.mxu0 0
    %121 = vmatprep.mubr.bf16.mxu0 0
    %122 = vmatmul.mubr.bf16.gmra.mrb[0].mxu0 %v87
    %v123 = vpop.f32.mrb[0].mxu0
    %v124 = vadd.f32 %v66, %v123
    %v125 = vpop.f32.mrb[0].mxu0
    %v126 = vpop.f32.mrb[0].mxu0
    %v127 = vadd.f32 %v66, %v126
    %v128 = vpop.f32.mrb[0].mxu0
    %129 = vdwg.mxu0
    %v130 = vpack.c.bf16 %v127, %v124
    %v132 = vunpack.c.l.b16 %v130
    %v133 = vunpack.c.h.b16 %v130
    %v134 = vpack.c.b16 %v132, %v132
    %v135 = vpack.c.b16 %v133, %v133
    %vm138 = vcmask 257024
    %139 = vst.msk [vmem:[#allocation8] sm:$0xf] %vm138, %v134
    %140 = vst.msk [vmem:[#allocation8 + $0x4] sm:$0xf] %vm138, %v135
    // Predicated region
    $region26: #{transformer_forward.18} parent=1 // pred_check
      _
    $region27: #{transformer_forward.18} parent=1 // pred_check_branch
      %142 = sbr.rel (0) target = $region29
    $region28: #{transformer_forward.18} parent=1 // pred_region
      %s144 = ssub.s32 128, 128
      %145 = vsyncadd [#allocation4], %s144
      %s146 = sshll.u32 [#allocation8], 4
      %s147 = int_to_ptr.vmem [resolvable:$true] %s146
      %152 = dma.vmem_to_hbm [thread:$0]  %s147, 128, %s3, [#allocation4], 64, 64, 4
    $region29: #{transformer_forward.18} parent=1 // pred_fallthru
      _
    // Predicated region
    $region30: #{transformer_forward.18} parent=1 // pred_check
      _
    $region31: #{transformer_forward.18} parent=1 // pred_check_branch
      %154 = sbr.rel (0) target = $region33
    $region32: #{transformer_forward.18} parent=1 // pred_region
      %155 = dma.done [#allocation4], 128
    $region33: #{transformer_forward.18} parent=1 // pred_fallthru
      _
    %156 = vsyncpa [#allocation3], 1
    %157 = vsyncpa [#allocation6], 1
    %158 = vsyncpa [#allocation4], 1

// kernel: transformer_forward.15
$region0: #{transformer_forward.15}
  #allocation0 [shape = 'u32[]', space=smem, size = 0x4, offset = 0x4, fixed_abs, tag = 'smem constant byte address 0x4 - core index']
  #allocation1 [shape = 'u32[144,128]{1,0:T(1,128)}', space=vmem, size = 0x12000, scoped, tag = 'internal scratch']
  %s0 = inlined_call_operand.hbm [shape: bf16[16,32], index: 0, kind: input, shape index: {}]
  %s1 = inlined_call_operand.hbm [shape: f32[1,32], index: 1, kind: input, shape index: {}]
  %s2 = inlined_call_operand.hbm [shape: f32[1,32], index: 2, kind: input, shape index: {}]
  %s3 = inlined_call_operand.hbm [shape: bf16[16,32], index: 3, kind: output, shape index: {}]
  %s4 = sld [smem:[#allocation0]]
  $region34: #{transformer_forward.15} parent=0
    _
  %s6 = ssub.s32 1, %s4
  %s7 = scalar_select 0, %s6, %s4
  $region1: #{transformer_forward.15} parent=0
    #allocation2 [shape = 'u8[4096]{0}', space=vmem, size = 0x1000, scoped, tag = 'input window, operand 0, single buffered']
    #allocation3 [shape = 's32[1]{0}', space=sflag, size = 0x4, scoped, tag = 'scoped memory for transformer_forward.15']
    #allocation4 [shape = 's32[1]{0}', space=sflag, size = 0x4, scoped, tag = 'scoped memory for transformer_forward.15']
    #allocation5 [shape = 'u8[512]{0}', space=vmem, size = 0x400, scoped, tag = 'input window, operand 1, single buffered']
    #allocation6 [shape = 's32[1]{0}', space=sflag, size = 0x4, scoped, tag = 'scoped memory for transformer_forward.15']
    #allocation7 [shape = 'u8[512]{0}', space=vmem, size = 0x400, scoped, tag = 'input window, operand 2, single buffered']
    #allocation8 [shape = 'u8[4096]{0}', space=vmem, size = 0x1000, scoped, tag = 'output window, operand 0, single buffered']
    %8 = vsyncpa [#allocation3], 0
    %9 = vsyncpa [#allocation6], 0
    %10 = vsyncpa [#allocation4], 0
    // Predicated region
    $region2: #{transformer_forward.15} parent=1 // pred_check
      _
    $region3: #{transformer_forward.15} parent=1 // pred_check_branch
      %12 = sbr.rel (0) target = $region5
    $region4: #{transformer_forward.15} parent=1 // pred_region
      %s14 = ssub.s32 128, 128
      %15 = vsyncadd [#allocation3], %s14
      %s16 = sshll.u32 [#allocation2], 4
      %s17 = int_to_ptr.vmem [resolvable:$true] %s16
      %22 = dma.hbm_to_vmem [thread:$0]  %s0, 128, %s17, [#allocation3], 64, 64, 4
    $region5: #{transformer_forward.15} parent=1 // pred_fallthru
      _
    // Predicated region
    $region6: #{transformer_forward.15} parent=1 // pred_check
      _
    $region7: #{transformer_forward.15} parent=1 // pred_check_branch
      %24 = sbr.rel (0) target = $region9
    $region8: #{transformer_forward.15} parent=1 // pred_region
      %s26 = ssub.s32 16, 16
      %27 = vsyncadd [#allocation6], %s26
      %s29 = sshll.u32 [#allocation5], 4
      %s30 = int_to_ptr.vmem [resolvable:$true] %s29
      %32 = dma.hbm_to_vmem [thread:$0]  %s1, 16, %s30, [#allocation6]
    $region9: #{transformer_forward.15} parent=1 // pred_fallthru
      _
    // Predicated region
    $region10: #{transformer_forward.15} parent=1 // pred_check
      _
    $region11: #{transformer_forward.15} parent=1 // pred_check_branch
      %34 = sbr.rel (0) target = $region13
    $region12: #{transformer_forward.15} parent=1 // pred_region
      %s36 = ssub.s32 16, 16
      %37 = vsyncadd [#allocation6], %s36
      %s39 = sshll.u32 [#allocation7], 4
      %s40 = int_to_ptr.vmem [resolvable:$true] %s39
      %42 = dma.hbm_to_vmem [thread:$0]  %s2, 16, %s40, [#allocation6]
    $region13: #{transformer_forward.15} parent=1 // pred_fallthru
      _
    // Predicated region
    $region14: #{transformer_forward.15} parent=1 // pred_check
      _
    $region15: #{transformer_forward.15} parent=1 // pred_check_branch
      %44 = sbr.rel (0) target = $region17
    $region16: #{transformer_forward.15} parent=1 // pred_region
      %45 = dma.done [#allocation3], 128
    $region17: #{transformer_forward.15} parent=1 // pred_fallthru
      _
    // Predicated region
    $region18: #{transformer_forward.15} parent=1 // pred_check
      _
    $region19: #{transformer_forward.15} parent=1 // pred_check_branch
      %47 = sbr.rel (0) target = $region21
    $region20: #{transformer_forward.15} parent=1 // pred_region
      %48 = dma.done [#allocation6], 16
    $region21: #{transformer_forward.15} parent=1 // pred_fallthru
      _
    // Predicated region
    $region22: #{transformer_forward.15} parent=1 // pred_check
      _
    $region23: #{transformer_forward.15} parent=1 // pred_check_branch
      %50 = sbr.rel (0) target = $region25
    $region24: #{transformer_forward.15} parent=1 // pred_region
      %51 = dma.done [#allocation6], 16
    $region25: #{transformer_forward.15} parent=1 // pred_fallthru
      _
    %v52 = vld [vmem:[#allocation2] sm:$0xf]
    %v53 = vld [vmem:[#allocation2 + $0x4] sm:$0xf]
    %v54 = vunpack.c.l.bf16 %v52
    %v55 = vunpack.c.l.bf16 %v53
    %vm56 = vcmask 261120
    %v57 = vsel %vm56, %v54, 0.0
    %58 = vadd.xlane.f32.xlu0 %v57
    %v59 = vpop.xlane.xlu0 %58
    %v60 = vsel %vm56, %v55, 0.0
    %61 = vadd.xlane.f32.xlu0 %v60
    %v62 = vpop.xlane.xlu0 %61
    %v63 = vrcp.pop 32.0
    %v64 = vmul.f32 %v59, %v63
    %v65 = vmul.f32 %v62, %v63
    %v66 = vsub.f32 %v54, %v64
    %v67 = vsub.f32 %v55, %v65
    %v68 = vmul.f32 %v66, %v66
    %v69 = vmul.f32 %v67, %v67
    %v70 = vsel %vm56, %v68, 0.0
    %71 = vadd.xlane.f32.xlu0 %v70
    %v72 = vpop.xlane.xlu0 %71
    %v73 = vsel %vm56, %v69, 0.0
    %74 = vadd.xlane.f32.xlu0 %v73
    %v75 = vpop.xlane.xlu0 %74
    %v76 = vmul.f32 %v72, %v63
    %v77 = vmul.f32 %v75, %v63
    %v78 = vadd.f32 %v76, 1e-12
    %v79 = vadd.f32 %v77, 1e-12
    %v80 = vrsqrt.pop %v78
    %v81 = vrsqrt.pop %v79
    %v82 = vmul.f32 %v66, %v80
    %v83 = vmul.f32 %v67, %v81
    %v84 = vld [vmem:[#allocation5] sm:$0x1]
    %v86 = vlaneseq
    %v87 = vshrl.u32 %v86, 7
    %v88 = vsub.s32 0, %v87
    %v89 = vrot.slane %v84, %v88
    %v91 = vmul.f32 %v82, %v89
    %v92 = vmul.f32 %v83, %v89
    %v93 = vld [vmem:[#allocation7] sm:$0x1]
    %v95 = vlaneseq
    %v96 = vshrl.u32 %v95, 7
    %v97 = vsub.s32 0, %v96
    %v98 = vrot.slane %v93, %v97
    %v100 = vadd.f32 %v91, %v98
    %v101 = vadd.f32 %v92, %v98
    %v102 = vpack.c.bf16 %v101, %v100
    %v104 = vunpack.c.l.b16 %v102
    %v105 = vunpack.c.h.b16 %v102
    %v106 = vpack.c.b16 %v104, %v104
    %v107 = vpack.c.b16 %v105, %v105
    %vm110 = vcmask 257024
    %111 = vst.msk [vmem:[#allocation8] sm:$0xf] %vm110, %v106
    %112 = vst.msk [vmem:[#allocation8 + $0x4] sm:$0xf] %vm110, %v107
    // Predicated region
    $region26: #{transformer_forward.15} parent=1 // pred_check
      _
    $region27: #{transformer_forward.15} parent=1 // pred_check_branch
      %114 = sbr.rel (0) target = $region29
    $region28: #{transformer_forward.15} parent=1 // pred_region
      %s116 = ssub.s32 128, 128
      %117 = vsyncadd [#allocation4], %s116
      %s118 = sshll.u32 [#allocation8], 4
      %s119 = int_to_ptr.vmem [resolvable:$true] %s118
      %124 = dma.vmem_to_hbm [thread:$0]  %s119, 128, %s3, [#allocation4], 64, 64, 4
    $region29: #{transformer_forward.15} parent=1 // pred_fallthru
      _
    // Predicated region
    $region30: #{transformer_forward.15} parent=1 // pred_check
      _
    $region31: #{transformer_forward.15} parent=1 // pred_check_branch
      %126 = sbr.rel (0) target = $region33
    $region32: #{transformer_forward.15} parent=1 // pred_region
      %127 = dma.done [#allocation4], 128
    $region33: #{transformer_forward.15} parent=1 // pred_fallthru
      _
    %128 = vsyncpa [#allocation3], 1
    %129 = vsyncpa [#allocation6], 1
    %130 = vsyncpa [#allocation4], 1

// kernel: transformer_forward.16
$region0: #{transformer_forward.16}
  #allocation0 [shape = 'u32[]', space=smem, size = 0x4, offset = 0x4, fixed_abs, tag = 'smem constant byte address 0x4 - core index']
  #allocation1 [shape = 'u32[144,128]{1,0:T(1,128)}', space=vmem, size = 0x12000, scoped, tag = 'internal scratch']
  %s0 = inlined_call_operand.hbm [shape: bf16[16,32], index: 0, kind: input, shape index: {}]
  %s1 = inlined_call_operand.hbm [shape: bf16[32,96], index: 1, kind: input, shape index: {}]
  %s2 = inlined_call_operand.hbm [shape: f32[1,96], index: 2, kind: input, shape index: {}]
  %s3 = inlined_call_operand.hbm [shape: bf16[16,96], index: 3, kind: output, shape index: {}]
  %s4 = sld [smem:[#allocation0]]
  $region34: #{transformer_forward.16} parent=0
    _
  %s6 = ssub.s32 1, %s4
  %s7 = scalar_select 0, %s6, %s4
  $region1: #{transformer_forward.16} parent=0
    #allocation2 [shape = 'u8[4096]{0}', space=vmem, size = 0x1000, scoped, tag = 'input window, operand 0, single buffered']
    #allocation3 [shape = 's32[1]{0}', space=sflag, size = 0x4, scoped, tag = 'scoped memory for transformer_forward.16']
    #allocation4 [shape = 's32[1]{0}', space=sflag, size = 0x4, scoped, tag = 'scoped memory for transformer_forward.16']
    #allocation5 [shape = 'u8[8192]{0}', space=vmem, size = 0x2000, scoped, tag = 'input window, operand 1, single buffered']
    #allocation6 [shape = 's32[1]{0}', space=sflag, size = 0x4, scoped, tag = 'scoped memory for transformer_forward.16']
    #allocation7 [shape = 'u8[512]{0}', space=vmem, size = 0x400, scoped, tag = 'input window, operand 2, single buffered']
    #allocation8 [shape = 'u8[4096]{0}', space=vmem, size = 0x1000, scoped, tag = 'output window, operand 0, single buffered']
    %8 = vsyncpa [#allocation3], 0
    %9 = vsyncpa [#allocation6], 0
    %10 = vsyncpa [#allocation4], 0
    // Predicated region
    $region2: #{transformer_forward.16} parent=1 // pred_check
      _
    $region3: #{transformer_forward.16} parent=1 // pred_check_branch
      %12 = sbr.rel (0) target = $region5
    $region4: #{transformer_forward.16} parent=1 // pred_region
      %s14 = ssub.s32 128, 128
      %15 = vsyncadd [#allocation3], %s14
      %s16 = sshll.u32 [#allocation2], 4
      %s17 = int_to_ptr.vmem [resolvable:$true] %s16
      %22 = dma.hbm_to_vmem [thread:$0]  %s0, 128, %s17, [#allocation3], 64, 64, 4
    $region5: #{transformer_forward.16} parent=1 // pred_fallthru
      _
    // Predicated region
    $region6: #{transformer_forward.16} parent=1 // pred_check
      _
    $region7: #{transformer_forward.16} parent=1 // pred_check_branch
      %24 = sbr.rel (0) target = $region9
    $region8: #{transformer_forward.16} parent=1 // pred_region
      %s26 = ssub.s32 256, 256
      %27 = vsyncadd [#allocation6], %s26
      %s28 = sshll.u32 [#allocation5], 4
      %s29 = int_to_ptr.vmem [resolvable:$true] %s28
      %34 = dma.hbm_to_vmem [thread:$0]  %s1, 256, %s29, [#allocation6], 64, 64, 4
    $region9: #{transformer_forward.16} parent=1 // pred_fallthru
      _
    // Predicated region
    $region10: #{transformer_forward.16} parent=1 // pred_check
      _
    $region11: #{transformer_forward.16} parent=1 // pred_check_branch
      %36 = sbr.rel (0) target = $region13
    $region12: #{transformer_forward.16} parent=1 // pred_region
      %s38 = ssub.s32 16, 16
      %39 = vsyncadd [#allocation6], %s38
      %s41 = sshll.u32 [#allocation7], 4
      %s42 = int_to_ptr.vmem [resolvable:$true] %s41
      %44 = dma.hbm_to_vmem [thread:$0]  %s2, 16, %s42, [#allocation6]
    $region13: #{transformer_forward.16} parent=1 // pred_fallthru
      _
    // Predicated region
    $region14: #{transformer_forward.16} parent=1 // pred_check
      _
    $region15: #{transformer_forward.16} parent=1 // pred_check_branch
      %46 = sbr.rel (0) target = $region17
    $region16: #{transformer_forward.16} parent=1 // pred_region
      %47 = dma.done [#allocation3], 128
    $region17: #{transformer_forward.16} parent=1 // pred_fallthru
      _
    // Predicated region
    $region18: #{transformer_forward.16} parent=1 // pred_check
      _
    $region19: #{transformer_forward.16} parent=1 // pred_check_branch
      %49 = sbr.rel (0) target = $region21
    $region20: #{transformer_forward.16} parent=1 // pred_region
      %50 = dma.done [#allocation6], 256
    $region21: #{transformer_forward.16} parent=1 // pred_fallthru
      _
    // Predicated region
    $region22: #{transformer_forward.16} parent=1 // pred_check
      _
    $region23: #{transformer_forward.16} parent=1 // pred_check_branch
      %52 = sbr.rel (0) target = $region25
    $region24: #{transformer_forward.16} parent=1 // pred_region
      %53 = dma.done [#allocation6], 16
    $region25: #{transformer_forward.16} parent=1 // pred_fallthru
      _
    %v55 = vld [vmem:[#allocation2] sm:$0xf]
    %v56 = vld [vmem:[#allocation2 + $0x4] sm:$0xf]
    %v57 = vld [vmem:[#allocation5] sm:$0xf]
    %v58 = vld [vmem:[#allocation5 + $0x4] sm:$0xf]
    %v59 = vld [vmem:[#allocation5 + $0x8] sm:$0xf]
    %v60 = vld [vmem:[#allocation5 + $0xc] sm:$0xf]
    %v61 = vld [vmem:[#allocation7] sm:$0x1]
    %v63 = vlaneseq
    %v64 = vshrl.u32 %v63, 7
    %v65 = vsub.s32 0, %v64
    %v66 = vrot.slane %v61, %v65
    %v70 = vunpack.c.l.b16 %v55
    %v71 = vunpack.c.l.b16 %v56
    %v72 = vpack.c.b16 %v71, %v70
    %v77 = vunpack.c.l.b16 %v57
    %v78 = vunpack.c.l.b16 %v58
    %v79 = vunpack.c.l.b16 %v59
    %v80 = vunpack.c.l.b16 %v60
    %v81 = vpack.c.b16 %v78, %v77
    %v82 = vpack.c.b16 %v80, %v79
    %vm85 = vcmask 261120
    %v87 = vsel %vm85, %v72, 0
    %89 = vmatprep.subr.bf16.mxu0 0
    %90 = vmatpush1.bf16.msra.mxu0 %v81
    %91 = vmatprep.subr.bf16.mxu0 0
    %92 = vmatpush1.bf16.msra.mxu0 %v82
    %93 = vmatprep.subr.bf16.mxu0 0
    %94 = vmatpush1.bf16.msra.mxu0 0
    %95 = vmatprep.subr.bf16.mxu0 0
    %96 = vmatpush1.bf16.msra.mxu0 0
    %97 = vmatprep.subr.bf16.mxu0 0
    %98 = vmatpush1.bf16.msra.mxu0 0
    %99 = vmatprep.subr.bf16.mxu0 0
    %100 = vmatpush1.bf16.msra.mxu0 0
    %101 = vmatprep.subr.bf16.mxu0 0
    %102 = vmatpush1.bf16.msra.mxu0 0
    %103 = vmatprep.subr.bf16.mxu0 0
    %104 = vmatpush1.bf16.msra.mxu0 0
    %105 = vmatprep.subr.bf16.mxu0 0
    %106 = vmatpush1.bf16.msra.mxu0 0
    %107 = vmatprep.subr.bf16.mxu0 0
    %108 = vmatpush1.bf16.msra.mxu0 0
    %109 = vmatprep.subr.bf16.mxu0 0
    %110 = vmatpush1.bf16.msra.mxu0 0
    %111 = vmatprep.subr.bf16.mxu0 0
    %112 = vmatpush1.bf16.msra.mxu0 0
    %113 = vmatprep.subr.bf16.mxu0 0
    %114 = vmatpush1.bf16.msra.mxu0 0
    %115 = vmatprep.subr.bf16.mxu0 0
    %116 = vmatpush1.bf16.msra.mxu0 0
    %117 = vmatprep.subr.bf16.mxu0 0
    %118 = vmatpush1.bf16.msra.mxu0 0
    %119 = vmatprep.subr.bf16.mxu0 0
    %120 = vmatpush1.bf16.msra.mxu0 0
    %121 = vmatprep.mubr.bf16.mxu0 0
    %122 = vmatmul.mubr.bf16.gmra.mrb[0].mxu0 %v87
    %v123 = vpop.f32.mrb[0].mxu0
    %v124 = vadd.f32 %v66, %v123
    %v125 = vpop.f32.mrb[0].mxu0
    %v126 = vpop.f32.mrb[0].mxu0
    %v127 = vadd.f32 %v66, %v126
    %v128 = vpop.f32.mrb[0].mxu0
    %129 = vdwg.mxu0
    %v130 = vpack.c.bf16 %v127, %v124
    %v132 = vunpack.c.l.b16 %v130
    %v133 = vunpack.c.h.b16 %v130
    %v134 = vpack.c.b16 %v132, %v132
    %v135 = vpack.c.b16 %v133, %v133
    %vm138 = vcmask 781312
    %139 = vst.msk [vmem:[#allocation8] sm:$0xf] %vm138, %v134
    %140 = vst.msk [vmem:[#allocation8 + $0x4] sm:$0xf] %vm138, %v135
    // Predicated region
    $region26: #{transformer_forward.16} parent=1 // pred_check
      _
    $region27: #{transformer_forward.16} parent=1 // pred_check_branch
      %142 = sbr.rel (0) target = $region29
    $region28: #{transformer_forward.16} parent=1 // pred_region
      %s144 = ssub.s32 128, 128
      %145 = vsyncadd [#allocation4], %s144
      %s146 = sshll.u32 [#allocation8], 4
      %s147 = int_to_ptr.vmem [resolvable:$true] %s146
      %152 = dma.vmem_to_hbm [thread:$0]  %s147, 128, %s3, [#allocation4], 64, 64, 4
    $region29: #{transformer_forward.16} parent=1 // pred_fallthru
      _
    // Predicated region
    $region30: #{transformer_forward.16} parent=1 // pred_check
      _
    $region31: #{transformer_forward.16} parent=1 // pred_check_branch
      %154 = sbr.rel (0) target = $region33
    $region32: #{transformer_forward.16} parent=1 // pred_region
      %155 = dma.done [#allocation4], 128
    $region33: #{transformer_forward.16} parent=1 // pred_fallthru
      _
    %156 = vsyncpa [#allocation3], 1
    %157 = vsyncpa [#allocation6], 1
    %158 = vsyncpa [#allocation4], 1

// kernel: transformer_forward.17
$region0: #{transformer_forward.17}
  #allocation0 [shape = 'u32[]', space=smem, size = 0x4, offset = 0x4, fixed_abs, tag = 'smem constant byte address 0x4 - core index']
  #allocation1 [shape = 'u32[144,128]{1,0:T(1,128)}', space=vmem, size = 0x12000, scoped, tag = 'internal scratch']
  %s0 = inlined_call_operand.hbm [shape: bf16[2,8,96], index: 0, kind: input, shape index: {}]
  %s1 = inlined_call_operand.hbm [shape: f32[2,1,8], index: 1, kind: input, shape index: {}]
  %s2 = inlined_call_operand.hbm [shape: bf16[2,4,8,8], index: 2, kind: output, shape index: {0}]
  %s3 = inlined_call_operand.hbm [shape: bf16[2,8,32], index: 3, kind: output, shape index: {1}]
  %4 = xla_tuple %s2, %s3
  %s5 = sld [smem:[#allocation0]]
  $region57: #{transformer_forward.17} parent=0
    _
  %s7 = ssub.s32 1, %s5
  %s8 = scalar_select 0, %s7, %s5
  $region1: #{transformer_forward.17} parent=0
    #allocation2 [shape = 'u8[4096]{0}', space=vmem, size = 0x1000, scoped, tag = 'input window, operand 0']
    #allocation3 [shape = 's32[2]{0}', space=sflag, size = 0x8, scoped, tag = 'scoped memory for transformer_forward.17']
    #allocation4 [shape = 's32[2]{0}', space=sflag, size = 0x8, scoped, tag = 'scoped memory for transformer_forward.17']
    #allocation5 [shape = 'u8[1024]{0}', space=vmem, size = 0x400, scoped, tag = 'input window, operand 1']
    #allocation6 [shape = 's32[2]{0}', space=sflag, size = 0x8, scoped, tag = 'scoped memory for transformer_forward.17']
    #allocation7 [shape = 'u8[16384]{0}', space=vmem, size = 0x4000, scoped, tag = 'output window, operand 0']
    #allocation8 [shape = 'u8[4096]{0}', space=vmem, size = 0x1000, scoped, tag = 'output window, operand 1']
    #allocation9 [shape = 's32[2]{0}', space=sflag, size = 0x8, scoped, tag = 'scoped memory for transformer_forward.17']
    %9 = vsyncpa [#allocation3], 0
    %s10 = scalar_lea.sflag [#allocation3], 1
    %11 = vsyncpa %s10, 0
    %12 = vsyncpa [#allocation6], 0
    %s13 = scalar_lea.sflag [#allocation6], 1
    %14 = vsyncpa %s13, 0
    %15 = vsyncpa [#allocation4], 0
    %s16 = scalar_lea.sflag [#allocation4], 1
    %17 = vsyncpa %s16, 0
    %18 = vsyncpa [#allocation9], 0
    %s19 = scalar_lea.sflag [#allocation9], 1
    %20 = vsyncpa %s19, 0
    loop: start=0, step=1, limit=4
    $region2: #{transformer_forward.17} parent=1 // loop_pre_header
      _
    $region3: #{transformer_forward.17} parent=1 // loop_header
      %s22 = sphi 0, %s26
      %p23 = scmp.ge.s32.totalorder %s22, 4
      %s32 = sphi 0, %s34
      %s35 = sphi 0, %s32
      %s36 = sphi 0, %s35
      %s52 = sphi 0, %s36
      %s58 = sphi 0, %s60
      %s61 = sphi 0, %s58
      %s62 = sphi 0, %s61
      %s78 = sphi 0, %s62
      %s84 = sphi 0, %s86
      %s87 = sphi 0, %s84
      %s88 = sphi 0, %s87
      %s104 = sphi 0, %s88
      %s110 = sphi 0, %s112
      %s113 = sphi 0, %s110
      %s114 = sphi 0, %s113
      %s130 = sphi 0, %s114
    $region4: #{transformer_forward.17} parent=1 // loop_header_branch
      %25 = sbr.rel (%p23) target = $region8
    $region5: #{transformer_forward.17} parent=1 // loop_body
      %s27 = ssub.s32 %s22, 1
      %s28 = ssub.s32 %s22, 2
      %s29 = sadd.s32 %s22, 1
      %s30 = ssub.s32 %s22, %s29
      %p31 = scmp.eq.s32.totalorder %s30, 0
      %s33 = sadd.s32 %s32, 1
      %s34 = scalar_select %p31, %s32, %s33
      %p37 = pneg %p31
      %p38 = scmp.eq.s32.totalorder %s22, 1
      %p39 = por %p37, %p38
      %p40 = scmp.ne.s32.totalorder %s32, %s35
      %p41 = scmp.eq.s32.totalorder %s22, 0
      %p42 = por %p40, %p41
      %p43 = scmp.ne.s32.totalorder %s32, %s35
      %p44 = scmp.eq.s32.totalorder %s27, 1
      %p45 = por %p43, %p44
      %p46 = scmp.ne.s32.totalorder %s35, %s36
      %p47 = scmp.eq.s32.totalorder %s27, 0
      %p48 = por %p46, %p47
      %p49 = scmp.ne.s32.totalorder %s35, %s36
      %p50 = scmp.eq.s32.totalorder %s28, 1
      %p51 = por %p49, %p50
      %p53 = scmp.ne.s32.totalorder %s36, %s52
      %p54 = scmp.eq.s32.totalorder %s28, 0
      %p55 = por %p53, %p54
      %s56 = ssub.s32 %s22, %s29
      %p57 = scmp.eq.s32.totalorder %s56, 0
      %s59 = sadd.s32 %s58, 1
      %s60 = scalar_select %p57, %s58, %s59
      %p63 = pneg %p57
      %p64 = scmp.eq.s32.totalorder %s22, 1
      %p65 = por %p63, %p64
      %p66 = scmp.ne.s32.totalorder %s58, %s61
      %p67 = scmp.eq.s32.totalorder %s22, 0
      %p68 = por %p66, %p67
      %p69 = scmp.ne.s32.totalorder %s58, %s61
      %p70 = scmp.eq.s32.totalorder %s27, 1
      %p71 = por %p69, %p70
      %p72 = scmp.ne.s32.totalorder %s61, %s62
      %p73 = scmp.eq.s32.totalorder %s27, 0
      %p74 = por %p72, %p73
      %p75 = scmp.ne.s32.totalorder %s61, %s62
      %p76 = scmp.eq.s32.totalorder %s28, 1
      %p77 = por %p75, %p76
      %p79 = scmp.ne.s32.totalorder %s62, %s78
      %p80 = scmp.eq.s32.totalorder %s28, 0
      %p81 = por %p79, %p80
      %s82 = ssub.s32 %s22, %s29
      %p83 = scmp.eq.s32.totalorder %s82, 0
      %s85 = sadd.s32 %s84, 1
      %s86 = scalar_select %p83, %s84, %s85
      %p89 = pneg %p83
      %p90 = scmp.eq.s32.totalorder %s22, 1
      %p91 = por %p89, %p90
      %p92 = scmp.ne.s32.totalorder %s84, %s87
      %p93 = scmp.eq.s32.totalorder %s22, 0
      %p94 = por %p92, %p93
      %p95 = scmp.ne.s32.totalorder %s84, %s87
      %p96 = scmp.eq.s32.totalorder %s27, 1
      %p97 = por %p95, %p96
      %p98 = scmp.ne.s32.totalorder %s87, %s88
      %p99 = scmp.eq.s32.totalorder %s27, 0
      %p100 = por %p98, %p99
      %p101 = scmp.ne.s32.totalorder %s87, %s88
      %p102 = scmp.eq.s32.totalorder %s28, 1
      %p103 = por %p101, %p102
      %p105 = scmp.ne.s32.totalorder %s88, %s104
      %p106 = scmp.eq.s32.totalorder %s28, 0
      %p107 = por %p105, %p106
      %s108 = ssub.s32 %s22, %s29
      %p109 = scmp.eq.s32.totalorder %s108, 0
      %s111 = sadd.s32 %s110, 1
      %s112 = scalar_select %p109, %s110, %s111
      %p115 = pneg %p109
      %p116 = scmp.eq.s32.totalorder %s22, 1
      %p117 = por %p115, %p116
      %p118 = scmp.ne.s32.totalorder %s110, %s113
      %p119 = scmp.eq.s32.totalorder %s22, 0
      %p120 = por %p118, %p119
      %p121 = scmp.ne.s32.totalorder %s110, %s113
      %p122 = scmp.eq.s32.totalorder %s27, 1
      %p123 = por %p121, %p122
      %p124 = scmp.ne.s32.totalorder %s113, %s114
      %p125 = scmp.eq.s32.totalorder %s27, 0
      %p126 = por %p124, %p125
      %p127 = scmp.ne.s32.totalorder %s113, %s114
      %p128 = scmp.eq.s32.totalorder %s28, 1
      %p129 = por %p127, %p128
      %p131 = scmp.ne.s32.totalorder %s114, %s130
      %p132 = scmp.eq.s32.totalorder %s28, 0
      %p133 = por %p131, %p132
      %p134 = scmp.le.s32.totalorder 1, %s22
      %p135 = scmp.lt.s32.totalorder %s22, 3
      %p136 = pnand %p134, %p135
      %p137 = pneg %p136
      // Predicated region
      $region9: #{transformer_forward.17} parent=5 // pred_check
        _
      $region10: #{transformer_forward.17} parent=5 // pred_check_branch
        %139 = sbr.rel (%p136) target = $region12
      $region11: #{transformer_forward.17} parent=5 // pred_region
        %s140 = ssub.s32 %s22, 1
      $region12: #{transformer_forward.17} parent=5 // pred_fallthru
        _
      %p141 = scmp.lt.s32.totalorder %s22, 2
      // Predicated region
      $region13: #{transformer_forward.17} parent=5 // pred_check
        %p142 = pneg %p141
      $region14: #{transformer_forward.17} parent=5 // pred_check_branch
        %144 = sbr.rel (%p142) target = $region16
      $region15: #{transformer_forward.17} parent=5 // pred_region
        // Predicated region
        $region17: #{transformer_forward.17} parent=15 // pred_check
          %p145 = pneg %p42
        $region18: #{transformer_forward.17} parent=15 // pred_check_branch
          %147 = sbr.rel (%p145) target = $region20
        $region19: #{transformer_forward.17} parent=15 // pred_region
          %s148 = sand.u32 %s32, 1
          %s149 = scalar_lea.sflag [#allocation3], %s148
          %s150 = sand.u32 %s32, 1
          %s151 = smul.addr %s150, 4
          %s152 = scalar_lea.vmem [#allocation2], %s151
          %s154 = ssub.s32 64, 64
          %155 = vsyncadd %s149, %s154
          %s156 = smul.addr %s22, 64
          %s157 = scalar_lea.hbm %s0, %s156
          %s159 = sshll.u32 %s152, 4
          %s160 = int_to_ptr.vmem [resolvable:$true] %s159
          %162 = dma.hbm_to_vmem [thread:$0]  %s157, 64, %s160, %s149
        $region20: #{transformer_forward.17} parent=15 // pred_fallthru
          _
        // Predicated region
        $region21: #{transformer_forward.17} parent=15 // pred_check
          %p163 = pneg %p68
        $region22: #{transformer_forward.17} parent=15 // pred_check_branch
          %165 = sbr.rel (%p163) target = $region24
        $region23: #{transformer_forward.17} parent=15 // pred_region
          %s166 = sand.u32 %s58, 1
          %s167 = scalar_lea.sflag [#allocation6], %s166
          %s168 = sand.u32 %s58, 1
          %s169 = scalar_lea.vmem [#allocation5], %s168
          %s171 = ssub.s32 16, 16
          %172 = vsyncadd %s167, %s171
          %s173 = smul.addr %s22, 16
          %s174 = scalar_lea.hbm %s1, %s173
          %s176 = sshll.u32 %s169, 4
          %s177 = int_to_ptr.vmem [resolvable:$true] %s176
          %179 = dma.hbm_to_vmem [thread:$0]  %s174, 16, %s177, %s167
        $region24: #{transformer_forward.17} parent=15 // pred_fallthru
          _
      $region16: #{transformer_forward.17} parent=5 // pred_fallthru
        _
      %p180 = scmp.le.s32.totalorder 1, %s22
      %p181 = scmp.lt.s32.totalorder %s22, 3
      %p182 = pnand %p180, %p181
      %p183 = pneg %p182
      // Predicated region
      $region25: #{transformer_forward.17} parent=5 // pred_check
        _
      $region26: #{transformer_forward.17} parent=5 // pred_check_branch
        %185 = sbr.rel (%p182) target = $region28
      $region27: #{transformer_forward.17} parent=5 // pred_region
        %s186 = ssub.s32 %s22, 1
        %s187 = sand.u32 %s35, 1
        %s188 = scalar_lea.sflag [#allocation3], %s187
        %s189 = sand.u32 %s35, 1
        %s190 = smul.addr %s189, 4
        %s191 = scalar_lea.vmem [#allocation2], %s190
        // Predicated region
        $region29: #{transformer_forward.17} parent=27 // pred_check
          %p192 = pneg %p48
        $region30: #{transformer_forward.17} parent=27 // pred_check_branch
          %194 = sbr.rel (%p192) target = $region32
        $region31: #{transformer_forward.17} parent=27 // pred_region
          %195 = dma.done %s188, 64
        $region32: #{transformer_forward.17} parent=27 // pred_fallthru
          _
        %s196 = sand.u32 %s61, 1
        %s197 = scalar_lea.sflag [#allocation6], %s196
        %s198 = sand.u32 %s61, 1
        %s199 = scalar_lea.vmem [#allocation5], %s198
        // Predicated region
        $region33: #{transformer_forward.17} parent=27 // pred_check
          %p200 = pneg %p74
        $region34: #{transformer_forward.17} parent=27 // pred_check_branch
          %202 = sbr.rel (%p200) target = $region36
        $region35: #{transformer_forward.17} parent=27 // pred_region
          %203 = dma.done %s197, 16
        $region36: #{transformer_forward.17} parent=27 // pred_fallthru
          _
        %s204 = sand.u32 %s35, 1
        %s205 = scalar_lea.sflag [#allocation3], %s204
        %s206 = sand.u32 %s35, 1
        %s207 = smul.addr %s206, 4
        %s208 = scalar_lea.vmem [#allocation2], %s207
        %p209 = pneg %p48
        %p210 = pneg %p45
        %s211 = sand.u32 %s61, 1
        %s212 = scalar_lea.sflag [#allocation6], %s211
        %s213 = sand.u32 %s61, 1
        %s214 = scalar_lea.vmem [#allocation5], %s213
        %p215 = pneg %p74
        %p216 = pneg %p71
        %p217 = pneg %p100
        %p218 = pneg %p97
        %s219 = sand.u32 %s87, 1
        %s220 = scalar_lea.sflag [#allocation4], %s219
        %s221 = sand.u32 %s87, 1
        %s222 = smul.addr %s221, 16
        %s223 = scalar_lea.vmem [#allocation7], %s222
        %p224 = pneg %p126
        %p225 = pneg %p123
        %s226 = sand.u32 %s113, 1
        %s227 = scalar_lea.sflag [#allocation9], %s226
        %s228 = sand.u32 %s113, 1
        %s229 = smul.addr %s228, 4
        %s230 = scalar_lea.vmem [#allocation8], %s229
        %v233 = vld [vmem:[%s199] sm:$0x1]
        %v234 = vld [vmem:[%s191] sm:$0xf]
        %v235 = vmul.bf16 %v234, 1052065461
        %v237 = vlaneseq
        %v238 = vshrl.u32 %v237, 7
        %v239 = vsub.s32 0, %v238
        %v240 = vrot.slane %v233, %v239
        %v243 = vunpack.c.l.b16 %v234
        %v244 = vpack.c.b16 %v243, %v243
        %245 = vrot.lane.b32.xlu0 %v244, 96
        %v246 = vpop.permute.xlu0 %245
        %vm247 = vcmask 64512
        %v249 = vsel %vm247, %v235, 0
        %v252 = vsel %vm247, %v246, 0
        %254 = vmatprep.subr.bf16.mxu0 0
        %255 = vmatpush1.bf16.xpose.msra.mxu0 %v252
        %256 = vmatprep.subr.bf16.mxu0 0
        %257 = vmatpush1.bf16.xpose.msra.mxu0 0
        %258 = vmatprep.subr.bf16.mxu0 0
        %259 = vmatpush1.bf16.xpose.msra.mxu0 0
        %260 = vmatprep.subr.bf16.mxu0 0
        %261 = vmatpush1.bf16.xpose.msra.mxu0 0
        %262 = vmatprep.subr.bf16.mxu0 0
        %263 = vmatpush1.bf16.xpose.msra.mxu0 0
        %264 = vmatprep.subr.bf16.mxu0 0
        %265 = vmatpush1.bf16.xpose.msra.mxu0 0
        %266 = vmatprep.subr.bf16.mxu0 0
        %267 = vmatpush1.bf16.xpose.msra.mxu0 0
        %268 = vmatprep.subr.bf16.mxu0 0
        %269 = vmatpush1.bf16.xpose.msra.mxu0 0
        %270 = vmatprep.subr.bf16.mxu0 0
        %271 = vmatpush1.bf16.xpose.msra.mxu0 0
        %272 = vmatprep.subr.bf16.mxu0 0
        %273 = vmatpush1.bf16.xpose.msra.mxu0 0
        %274 = vmatprep.subr.bf16.mxu0 0
        %275 = vmatpush1.bf16.xpose.msra.mxu0 0
        %276 = vmatprep.subr.bf16.mxu0 0
        %277 = vmatpush1.bf16.xpose.msra.mxu0 0
        %278 = vmatprep.subr.bf16.mxu0 0
        %279 = vmatpush1.bf16.xpose.msra.mxu0 0
        %280 = vmatprep.subr.bf16.mxu0 0
        %281 = vmatpush1.bf16.xpose.msra.mxu0 0
        %282 = vmatprep.subr.bf16.mxu0 0
        %283 = vmatpush1.bf16.xpose.msra.mxu0 0
        %284 = vmatprep.subr.bf16.mxu0 0
        %285 = vmatpush1.bf16.xpose.msra.mxu0 0
        %286 = vmatprep.mubr.bf16.mxu0 0
        %287 = vmatmul.mubr.bf16.gmra.mrb[0].mxu0 %v249
        %v288 = vpop.f32.mrb[0].mxu0
        %v289 = vadd.f32 %v240, %v288
        %v290 = vpop.f32.mrb[0].mxu0
        %v291 = vpop.f32.mrb[0].mxu0
        %v292 = vpop.f32.mrb[0].mxu0
        %293 = vdwg.mxu0
        %v294 = vsel %vm247, %v289, -inf
        %295 = vmax.xlane.f32.xlu0 %v294
        %v296 = vpop.xlane.xlu0 %295
        %v297 = vsub.f32 %v289, %v296
        %v298 = vmul.f32 %v297, 1.442695
        %v299 = vpow.pop %v298
        %v300 = vsel %vm247, %v299, 0.0
        %301 = vadd.xlane.f32.xlu0 %v300
        %v302 = vpop.xlane.xlu0 %301
        %v303 = vrcp.pop %v302
        %v304 = vmul.f32 %v299, %v303
        %v305 = vpack.c.bf16 %v304, %v304
        %vm306 = vcmask 60416
        %307 = vst.msk [vmem:[%s223] sm:$0xf] %vm306, %v305
        %308 = vrot.lane.b32.xlu0 %v244, 64
        %v309 = vpop.permute.xlu0 %308
        %v311 = vsel %vm247, %v305, 0
        %vm313 = vcmask 1043456
        %v315 = vsel %vm313, %v309, 0
        %317 = vmatprep.subr.bf16.mxu0 0
        %318 = vmatpush1.bf16.msra.mxu0 %v315
        %319 = vmatprep.subr.bf16.mxu0 0
        %320 = vmatpush1.bf16.msra.mxu0 0
        %321 = vmatprep.subr.bf16.mxu0 0
        %322 = vmatpush1.bf16.msra.mxu0 0
        %323 = vmatprep.subr.bf16.mxu0 0
        %324 = vmatpush1.bf16.msra.mxu0 0
        %325 = vmatprep.subr.bf16.mxu0 0
        %326 = vmatpush1.bf16.msra.mxu0 0
        %327 = vmatprep.subr.bf16.mxu0 0
        %328 = vmatpush1.bf16.msra.mxu0 0
        %329 = vmatprep.subr.bf16.mxu0 0
        %330 = vmatpush1.bf16.msra.mxu0 0
        %331 = vmatprep.subr.bf16.mxu0 0
        %332 = vmatpush1.bf16.msra.mxu0 0
        %333 = vmatprep.subr.bf16.mxu0 0
        %334 = vmatpush1.bf16.msra.mxu0 0
        %335 = vmatprep.subr.bf16.mxu0 0
        %336 = vmatpush1.bf16.msra.mxu0 0
        %337 = vmatprep.subr.bf16.mxu0 0
        %338 = vmatpush1.bf16.msra.mxu0 0
        %339 = vmatprep.subr.bf16.mxu0 0
        %340 = vmatpush1.bf16.msra.mxu0 0
        %341 = vmatprep.subr.bf16.mxu0 0
        %342 = vmatpush1.bf16.msra.mxu0 0
        %343 = vmatprep.subr.bf16.mxu0 0
        %344 = vmatpush1.bf16.msra.mxu0 0
        %345 = vmatprep.subr.bf16.mxu0 0
        %346 = vmatpush1.bf16.msra.mxu0 0
        %347 = vmatprep.subr.bf16.mxu0 0
        %348 = vmatpush1.bf16.msra.mxu0 0
        %349 = vmatprep.mubr.bf16.mxu0 0
        %350 = vmatmul.mubr.bf16.gmra.mrb[0].mxu0 %v311
        %v351 = vpop.f32.mrb[0].mxu0
        %v352 = vadd.f32 0.0, %v351
        %v353 = vpop.f32.mrb[0].mxu0
        %v354 = vpop.f32.mrb[0].mxu0
        %v355 = vpop.f32.mrb[0].mxu0
        %356 = vdwg.mxu0
        %v357 = vpack.c.bf16 %v352, %v352
        %358 = vst.msk [vmem:[%s230] sm:$0xf] %vm306, %v357
        %v359 = vld [vmem:[%s191] sm:$0xf]
        %v360 = vmul.bf16 %v359, 1052065461
        %v362 = vunpack.c.l.b16 %v360
        %v363 = vpack.c.b16 %v362, %v362
        %364 = vrot.lane.b32.xlu0 %v363, 120
        %v365 = vpop.permute.xlu0 %364
        %v367 = vunpack.c.l.b16 %v359
        %v368 = vpack.c.b16 %v367, %v367
        %369 = vrot.lane.b32.xlu0 %v368, 88
        %v370 = vpop.permute.xlu0 %369
        %v372 = vsel %vm247, %v365, 0
        %v375 = vsel %vm247, %v370, 0
        %377 = vmatprep.subr.bf16.mxu0 0
        %378 = vmatpush1.bf16.xpose.msra.mxu0 %v375
        %379 = vmatprep.subr.bf16.mxu0 0
        %380 = vmatpush1.bf16.xpose.msra.mxu0 0
        %381 = vmatprep.subr.bf16.mxu0 0
        %382 = vmatpush1.bf16.xpose.msra.mxu0 0
        %383 = vmatprep.subr.bf16.mxu0 0
        %384 = vmatpush1.bf16.xpose.msra.mxu0 0
        %385 = vmatprep.subr.bf16.mxu0 0
        %386 = vmatpush1.bf16.xpose.msra.mxu0 0
        %387 = vmatprep.subr.bf16.mxu0 0
        %388 = vmatpush1.bf16.xpose.msra.mxu0 0
        %389 = vmatprep.subr.bf16.mxu0 0
        %390 = vmatpush1.bf16.xpose.msra.mxu0 0
        %391 = vmatprep.subr.bf16.mxu0 0
        %392 = vmatpush1.bf16.xpose.msra.mxu0 0
        %393 = vmatprep.subr.bf16.mxu0 0
        %394 = vmatpush1.bf16.xpose.msra.mxu0 0
        %395 = vmatprep.subr.bf16.mxu0 0
        %396 = vmatpush1.bf16.xpose.msra.mxu0 0
        %397 = vmatprep.subr.bf16.mxu0 0
        %398 = vmatpush1.bf16.xpose.msra.mxu0 0
        %399 = vmatprep.subr.bf16.mxu0 0
        %400 = vmatpush1.bf16.xpose.msra.mxu0 0
        %401 = vmatprep.subr.bf16.mxu0 0
        %402 = vmatpush1.bf16.xpose.msra.mxu0 0
        %403 = vmatprep.subr.bf16.mxu0 0
        %404 = vmatpush1.bf16.xpose.msra.mxu0 0
        %405 = vmatprep.subr.bf16.mxu0 0
        %406 = vmatpush1.bf16.xpose.msra.mxu0 0
        %407 = vmatprep.subr.bf16.mxu0 0
        %408 = vmatpush1.bf16.xpose.msra.mxu0 0
        %409 = vmatprep.mubr.bf16.mxu0 0
        %410 = vmatmul.mubr.bf16.gmra.mrb[0].mxu0 %v372
        %v411 = vpop.f32.mrb[0].mxu0
        %v412 = vadd.f32 %v240, %v411
        %v413 = vpop.f32.mrb[0].mxu0
        %v414 = vpop.f32.mrb[0].mxu0
        %v415 = vpop.f32.mrb[0].mxu0
        %416 = vdwg.mxu0
        %v417 = vsel %vm247, %v412, -inf
        %418 = vmax.xlane.f32.xlu0 %v417
        %v419 = vpop.xlane.xlu0 %418
        %v420 = vsub.f32 %v412, %v419
        %v421 = vmul.f32 %v420, 1.442695
        %v422 = vpow.pop %v421
        %v423 = vsel %vm247, %v422, 0.0
        %424 = vadd.xlane.f32.xlu0 %v423
        %v425 = vpop.xlane.xlu0 %424
        %v426 = vrcp.pop %v425
        %v427 = vmul.f32 %v422, %v426
        %v428 = vpack.c.bf16 %v427, %v427
        %s429 = scalar_lea.vmem %s223, 4 [#allocation7]
        %430 = vst.msk [vmem:[%s429] sm:$0xf] %vm306, %v428
        %431 = vrot.lane.b32.xlu0 %v368, 56
        %v432 = vpop.permute.xlu0 %431
        %v434 = vsel %vm247, %v428, 0
        %v437 = vsel %vm313, %v432, 0
        %439 = vmatprep.subr.bf16.mxu0 0
        %440 = vmatpush1.bf16.msra.mxu0 %v437
        %441 = vmatprep.subr.bf16.mxu0 0
        %442 = vmatpush1.bf16.msra.mxu0 0
        %443 = vmatprep.subr.bf16.mxu0 0
        %444 = vmatpush1.bf16.msra.mxu0 0
        %445 = vmatprep.subr.bf16.mxu0 0
        %446 = vmatpush1.bf16.msra.mxu0 0
        %447 = vmatprep.subr.bf16.mxu0 0
        %448 = vmatpush1.bf16.msra.mxu0 0
        %449 = vmatprep.subr.bf16.mxu0 0
        %450 = vmatpush1.bf16.msra.mxu0 0
        %451 = vmatprep.subr.bf16.mxu0 0
        %452 = vmatpush1.bf16.msra.mxu0 0
        %453 = vmatprep.subr.bf16.mxu0 0
        %454 = vmatpush1.bf16.msra.mxu0 0
        %455 = vmatprep.subr.bf16.mxu0 0
        %456 = vmatpush1.bf16.msra.mxu0 0
        %457 = vmatprep.subr.bf16.mxu0 0
        %458 = vmatpush1.bf16.msra.mxu0 0
        %459 = vmatprep.subr.bf16.mxu0 0
        %460 = vmatpush1.bf16.msra.mxu0 0
        %461 = vmatprep.subr.bf16.mxu0 0
        %462 = vmatpush1.bf16.msra.mxu0 0
        %463 = vmatprep.subr.bf16.mxu0 0
        %464 = vmatpush1.bf16.msra.mxu0 0
        %465 = vmatprep.subr.bf16.mxu0 0
        %466 = vmatpush1.bf16.msra.mxu0 0
        %467 = vmatprep.subr.bf16.mxu0 0
        %468 = vmatpush1.bf16.msra.mxu0 0
        %469 = vmatprep.subr.bf16.mxu0 0
        %470 = vmatpush1.bf16.msra.mxu0 0
        %471 = vmatprep.mubr.bf16.mxu0 0
        %472 = vmatmul.mubr.bf16.gmra.mrb[0].mxu0 %v434
        %v473 = vpop.f32.mrb[0].mxu0
        %v474 = vadd.f32 0.0, %v473
        %v475 = vpop.f32.mrb[0].mxu0
        %v476 = vpop.f32.mrb[0].mxu0
        %v477 = vpop.f32.mrb[0].mxu0
        %478 = vdwg.mxu0
        %v479 = vpack.c.bf16 %v474, %v474
        %v481 = vunpack.c.l.b16 %v479
        %v482 = vpack.c.b16 %v481, %v481
        %483 = vrot.lane.b32.xlu0 %v482, 8
        %v484 = vpop.permute.xlu0 %483
        %vm486 = vcmask 126016
        %487 = vst.msk [vmem:[%s230] sm:$0xf] %vm486, %v484
        %v488 = vld [vmem:[%s191] sm:$0xf]
        %v489 = vmul.bf16 %v488, 1052065461
        %v491 = vunpack.c.l.b16 %v489
        %v492 = vpack.c.b16 %v491, %v491
        %493 = vrot.lane.b32.xlu0 %v492, 112
        %v494 = vpop.permute.xlu0 %493
        %v496 = vunpack.c.l.b16 %v488
        %v497 = vpack.c.b16 %v496, %v496
        %498 = vrot.lane.b32.xlu0 %v497, 80
        %v499 = vpop.permute.xlu0 %498
        %v501 = vsel %vm247, %v494, 0
        %v504 = vsel %vm247, %v499, 0
        %506 = vmatprep.subr.bf16.mxu0 0
        %507 = vmatpush1.bf16.xpose.msra.mxu0 %v504
        %508 = vmatprep.subr.bf16.mxu0 0
        %509 = vmatpush1.bf16.xpose.msra.mxu0 0
        %510 = vmatprep.subr.bf16.mxu0 0
        %511 = vmatpush1.bf16.xpose.msra.mxu0 0
        %512 = vmatprep.subr.bf16.mxu0 0
        %513 = vmatpush1.bf16.xpose.msra.mxu0 0
        %514 = vmatprep.subr.bf16.mxu0 0
        %515 = vmatpush1.bf16.xpose.msra.mxu0 0
        %516 = vmatprep.subr.bf16.mxu0 0
        %517 = vmatpush1.bf16.xpose.msra.mxu0 0
        %518 = vmatprep.subr.bf16.mxu0 0
        %519 = vmatpush1.bf16.xpose.msra.mxu0 0
        %520 = vmatprep.subr.bf16.mxu0 0
        %521 = vmatpush1.bf16.xpose.msra.mxu0 0
        %522 = vmatprep.subr.bf16.mxu0 0
        %523 = vmatpush1.bf16.xpose.msra.mxu0 0
        %524 = vmatprep.subr.bf16.mxu0 0
        %525 = vmatpush1.bf16.xpose.msra.mxu0 0
        %526 = vmatprep.subr.bf16.mxu0 0
        %527 = vmatpush1.bf16.xpose.msra.mxu0 0
        %528 = vmatprep.subr.bf16.mxu0 0
        %529 = vmatpush1.bf16.xpose.msra.mxu0 0
        %530 = vmatprep.subr.bf16.mxu0 0
        %531 = vmatpush1.bf16.xpose.msra.mxu0 0
        %532 = vmatprep.subr.bf16.mxu0 0
        %533 = vmatpush1.bf16.xpose.msra.mxu0 0
        %534 = vmatprep.subr.bf16.mxu0 0
        %535 = vmatpush1.bf16.xpose.msra.mxu0 0
        %536 = vmatprep.subr.bf16.mxu0 0
        %537 = vmatpush1.bf16.xpose.msra.mxu0 0
        %538 = vmatprep.mubr.bf16.mxu0 0
        %539 = vmatmul.mubr.bf16.gmra.mrb[0].mxu0 %v501
        %v540 = vpop.f32.mrb[0].mxu0
        %v541 = vadd.f32 %v240, %v540
        %v542 = vpop.f32.mrb[0].mxu0
        %v543 = vpop.f32.mrb[0].mxu0
        %v544 = vpop.f32.mrb[0].mxu0
        %545 = vdwg.mxu0
        %v546 = vsel %vm247, %v541, -inf
        %547 = vmax.xlane.f32.xlu0 %v546
        %v548 = vpop.xlane.xlu0 %547
        %v549 = vsub.f32 %v541, %v548
        %v550 = vmul.f32 %v549, 1.442695
        %v551 = vpow.pop %v550
        %v552 = vsel %vm247, %v551, 0.0
        %553 = vadd.xlane.f32.xlu0 %v552
        %v554 = vpop.xlane.xlu0 %553
        %v555 = vrcp.pop %v554
        %v556 = vmul.f32 %v551, %v555
        %v557 = vpack.c.bf16 %v556, %v556
        %s558 = scalar_lea.vmem %s223, 8 [#allocation7]
        %559 = vst.msk [vmem:[%s558] sm:$0xf] %vm306, %v557
        %560 = vrot.lane.b32.xlu0 %v497, 48
        %v561 = vpop.permute.xlu0 %560
        %v563 = vsel %vm247, %v557, 0
        %v566 = vsel %vm313, %v561, 0
        %568 = vmatprep.subr.bf16.mxu0 0
        %569 = vmatpush1.bf16.msra.mxu0 %v566
        %570 = vmatprep.subr.bf16.mxu0 0
        %571 = vmatpush1.bf16.msra.mxu0 0
        %572 = vmatprep.subr.bf16.mxu0 0
        %573 = vmatpush1.bf16.msra.mxu0 0
        %574 = vmatprep.subr.bf16.mxu0 0
        %575 = vmatpush1.bf16.msra.mxu0 0
        %576 = vmatprep.subr.bf16.mxu0 0
        %577 = vmatpush1.bf16.msra.mxu0 0
        %578 = vmatprep.subr.bf16.mxu0 0
        %579 = vmatpush1.bf16.msra.mxu0 0
        %580 = vmatprep.subr.bf16.mxu0 0
        %581 = vmatpush1.bf16.msra.mxu0 0
        %582 = vmatprep.subr.bf16.mxu0 0
        %583 = vmatpush1.bf16.msra.mxu0 0
        %584 = vmatprep.subr.bf16.mxu0 0
        %585 = vmatpush1.bf16.msra.mxu0 0
        %586 = vmatprep.subr.bf16.mxu0 0
        %587 = vmatpush1.bf16.msra.mxu0 0
        %588 = vmatprep.subr.bf16.mxu0 0
        %589 = vmatpush1.bf16.msra.mxu0 0
        %590 = vmatprep.subr.bf16.mxu0 0
        %591 = vmatpush1.bf16.msra.mxu0 0
        %592 = vmatprep.subr.bf16.mxu0 0
        %593 = vmatpush1.bf16.msra.mxu0 0
        %594 = vmatprep.subr.bf16.mxu0 0
        %595 = vmatpush1.bf16.msra.mxu0 0
        %596 = vmatprep.subr.bf16.mxu0 0
        %597 = vmatpush1.bf16.msra.mxu0 0
        %598 = vmatprep.subr.bf16.mxu0 0
        %599 = vmatpush1.bf16.msra.mxu0 0
        %600 = vmatprep.mubr.bf16.mxu0 0
        %601 = vmatmul.mubr.bf16.gmra.mrb[0].mxu0 %v563
        %v602 = vpop.f32.mrb[0].mxu0
        %v603 = vadd.f32 0.0, %v602
        %v604 = vpop.f32.mrb[0].mxu0
        %v605 = vpop.f32.mrb[0].mxu0
        %v606 = vpop.f32.mrb[0].mxu0
        %607 = vdwg.mxu0
        %v608 = vpack.c.bf16 %v603, %v603
        %v610 = vunpack.c.l.b16 %v608
        %v611 = vpack.c.b16 %v610, %v610
        %612 = vrot.lane.b32.xlu0 %v611, 16
        %v613 = vpop.permute.xlu0 %612
        %vm615 = vcmask 191616
        %616 = vst.msk [vmem:[%s230] sm:$0xf] %vm615, %v613
        %v617 = vld [vmem:[%s191] sm:$0xf]
        %v618 = vmul.bf16 %v617, 1052065461
        %v620 = vunpack.c.l.b16 %v618
        %v621 = vpack.c.b16 %v620, %v620
        %622 = vrot.lane.b32.xlu0 %v621, 104
        %v623 = vpop.permute.xlu0 %622
        %v625 = vunpack.c.l.b16 %v617
        %v626 = vpack.c.b16 %v625, %v625
        %627 = vrot.lane.b32.xlu0 %v626, 72
        %v628 = vpop.permute.xlu0 %627
        %v630 = vsel %vm247, %v623, 0
        %v633 = vsel %vm247, %v628, 0
        %635 = vmatprep.subr.bf16.mxu0 0
        %636 = vmatpush1.bf16.xpose.msra.mxu0 %v633
        %637 = vmatprep.subr.bf16.mxu0 0
        %638 = vmatpush1.bf16.xpose.msra.mxu0 0
        %639 = vmatprep.subr.bf16.mxu0 0
        %640 = vmatpush1.bf16.xpose.msra.mxu0 0
        %641 = vmatprep.subr.bf16.mxu0 0
        %642 = vmatpush1.bf16.xpose.msra.mxu0 0
        %643 = vmatprep.subr.bf16.mxu0 0
        %644 = vmatpush1.bf16.xpose.msra.mxu0 0
        %645 = vmatprep.subr.bf16.mxu0 0
        %646 = vmatpush1.bf16.xpose.msra.mxu0 0
        %647 = vmatprep.subr.bf16.mxu0 0
        %648 = vmatpush1.bf16.xpose.msra.mxu0 0
        %649 = vmatprep.subr.bf16.mxu0 0
        %650 = vmatpush1.bf16.xpose.msra.mxu0 0
        %651 = vmatprep.subr.bf16.mxu0 0
        %652 = vmatpush1.bf16.xpose.msra.mxu0 0
        %653 = vmatprep.subr.bf16.mxu0 0
        %654 = vmatpush1.bf16.xpose.msra.mxu0 0
        %655 = vmatprep.subr.bf16.mxu0 0
        %656 = vmatpush1.bf16.xpose.msra.mxu0 0
        %657 = vmatprep.subr.bf16.mxu0 0
        %658 = vmatpush1.bf16.xpose.msra.mxu0 0
        %659 = vmatprep.subr.bf16.mxu0 0
        %660 = vmatpush1.bf16.xpose.msra.mxu0 0
        %661 = vmatprep.subr.bf16.mxu0 0
        %662 = vmatpush1.bf16.xpose.msra.mxu0 0
        %663 = vmatprep.subr.bf16.mxu0 0
        %664 = vmatpush1.bf16.xpose.msra.mxu0 0
        %665 = vmatprep.subr.bf16.mxu0 0
        %666 = vmatpush1.bf16.xpose.msra.mxu0 0
        %667 = vmatprep.mubr.bf16.mxu0 0
        %668 = vmatmul.mubr.bf16.gmra.mrb[0].mxu0 %v630
        %v669 = vpop.f32.mrb[0].mxu0
        %v670 = vadd.f32 %v240, %v669
        %v671 = vpop.f32.mrb[0].mxu0
        %v672 = vpop.f32.mrb[0].mxu0
        %v673 = vpop.f32.mrb[0].mxu0
        %674 = vdwg.mxu0
        %v675 = vsel %vm247, %v670, -inf
        %676 = vmax.xlane.f32.xlu0 %v675
        %v677 = vpop.xlane.xlu0 %676
        %v678 = vsub.f32 %v670, %v677
        %v679 = vmul.f32 %v678, 1.442695
        %v680 = vpow.pop %v679
        %v681 = vsel %vm247, %v680, 0.0
        %682 = vadd.xlane.f32.xlu0 %v681
        %v683 = vpop.xlane.xlu0 %682
        %v684 = vrcp.pop %v683
        %v685 = vmul.f32 %v680, %v684
        %v686 = vpack.c.bf16 %v685, %v685
        %s687 = scalar_lea.vmem %s223, 12 [#allocation7]
        %688 = vst.msk [vmem:[%s687] sm:$0xf] %vm306, %v686
        %689 = vrot.lane.b32.xlu0 %v626, 40
        %v690 = vpop.permute.xlu0 %689
        %v692 = vsel %vm247, %v686, 0
        %v695 = vsel %vm313, %v690, 0
        %697 = vmatprep.subr.bf16.mxu0 0
        %698 = vmatpush1.bf16.msra.mxu0 %v695
        %699 = vmatprep.subr.bf16.mxu0 0
        %700 = vmatpush1.bf16.msra.mxu0 0
        %701 = vmatprep.subr.bf16.mxu0 0
        %702 = vmatpush1.bf16.msra.mxu0 0
        %703 = vmatprep.subr.bf16.mxu0 0
        %704 = vmatpush1.bf16.msra.mxu0 0
        %705 = vmatprep.subr.bf16.mxu0 0
        %706 = vmatpush1.bf16.msra.mxu0 0
        %707 = vmatprep.subr.bf16.mxu0 0
        %708 = vmatpush1.bf16.msra.mxu0 0
        %709 = vmatprep.subr.bf16.mxu0 0
        %710 = vmatpush1.bf16.msra.mxu0 0
        %711 = vmatprep.subr.bf16.mxu0 0
        %712 = vmatpush1.bf16.msra.mxu0 0
        %713 = vmatprep.subr.bf16.mxu0 0
        %714 = vmatpush1.bf16.msra.mxu0 0
        %715 = vmatprep.subr.bf16.mxu0 0
        %716 = vmatpush1.bf16.msra.mxu0 0
        %717 = vmatprep.subr.bf16.mxu0 0
        %718 = vmatpush1.bf16.msra.mxu0 0
        %719 = vmatprep.subr.bf16.mxu0 0
        %720 = vmatpush1.bf16.msra.mxu0 0
        %721 = vmatprep.subr.bf16.mxu0 0
        %722 = vmatpush1.bf16.msra.mxu0 0
        %723 = vmatprep.subr.bf16.mxu0 0
        %724 = vmatpush1.bf16.msra.mxu0 0
        %725 = vmatprep.subr.bf16.mxu0 0
        %726 = vmatpush1.bf16.msra.mxu0 0
        %727 = vmatprep.subr.bf16.mxu0 0
        %728 = vmatpush1.bf16.msra.mxu0 0
        %729 = vmatprep.mubr.bf16.mxu0 0
        %730 = vmatmul.mubr.bf16.gmra.mrb[0].mxu0 %v692
        %v731 = vpop.f32.mrb[0].mxu0
        %v732 = vadd.f32 0.0, %v731
        %v733 = vpop.f32.mrb[0].mxu0
        %v734 = vpop.f32.mrb[0].mxu0
        %v735 = vpop.f32.mrb[0].mxu0
        %736 = vdwg.mxu0
        %v737 = vpack.c.bf16 %v732, %v732
        %v739 = vunpack.c.l.b16 %v737
        %v740 = vpack.c.b16 %v739, %v739
        %741 = vrot.lane.b32.xlu0 %v740, 24
        %v742 = vpop.permute.xlu0 %741
        %vm744 = vcmask 257216
        %745 = vst.msk [vmem:[%s230] sm:$0xf] %vm744, %v742
        %s746 = sand.u32 %s87, 1
        %s747 = scalar_lea.sflag [#allocation4], %s746
        %s748 = sand.u32 %s87, 1
        %s749 = smul.addr %s748, 16
        %s750 = scalar_lea.vmem [#allocation7], %s749
        %s751 = sand.u32 %s113, 1
        %s752 = scalar_lea.sflag [#allocation9], %s751
        %s753 = sand.u32 %s113, 1
        %s754 = smul.addr %s753, 4
        %s755 = scalar_lea.vmem [#allocation8], %s754
        // Predicated region
        $region37: #{transformer_forward.17} parent=27 // pred_check
          %p756 = pneg %p97
        $region38: #{transformer_forward.17} parent=27 // pred_check_branch
          %758 = sbr.rel (%p756) target = $region40
        $region39: #{transformer_forward.17} parent=27 // pred_region
          %s760 = ssub.s32 256, 256
          %761 = vsyncadd %s747, %s760
          %s762 = smul.addr %s27, 4
          %s763 = smul.addr %s762, 64
          %s764 = scalar_lea.hbm %s2, %s763
          %s765 = sshll.u32 %s750, 4
          %s766 = int_to_ptr.vmem [resolvable:$true] %s765
          %771 = dma.vmem_to_hbm [thread:$0]  %s766, 256, %s764, %s747, 64, 64, 4
        $region40: #{transformer_forward.17} parent=27 // pred_fallthru
          _
        // Predicated region
        $region41: #{transformer_forward.17} parent=27 // pred_check
          %p772 = pneg %p123
        $region42: #{transformer_forward.17} parent=27 // pred_check_branch
          %774 = sbr.rel (%p772) target = $region44
        $region43: #{transformer_forward.17} parent=27 // pred_region
          %s776 = ssub.s32 64, 64
          %777 = vsyncadd %s752, %s776
          %s778 = smul.addr %s27, 64
          %s779 = scalar_lea.hbm %s3, %s778
          %s781 = sshll.u32 %s755, 4
          %s782 = int_to_ptr.vmem [resolvable:$true] %s781
          %784 = dma.vmem_to_hbm [thread:$0]  %s782, 64, %s779, %s752
        $region44: #{transformer_forward.17} parent=27 // pred_fallthru
          _
      $region28: #{transformer_forward.17} parent=5 // pred_fallthru
        _
      %p785 = scmp.le.s32.totalorder 2, %s22
      // Predicated region
      $region45: #{transformer_forward.17} parent=5 // pred_check
        %p786 = pneg %p785
      $region46: #{transformer_forward.17} parent=5 // pred_check_branch
        %788 = sbr.rel (%p786) target = $region48
      $region47: #{transformer_forward.17} parent=5 // pred_region
        %s789 = ssub.s32 %s22, 2
        // Predicated region
        $region49: #{transformer_forward.17} parent=47 // pred_check
          %p790 = pneg %p103
        $region50: #{transformer_forward.17} parent=47 // pred_check_branch
          %792 = sbr.rel (%p790) target = $region52
        $region51: #{transformer_forward.17} parent=47 // pred_region
          %s793 = sand.u32 %s88, 1
          %s794 = scalar_lea.sflag [#allocation4], %s793
          %s795 = sand.u32 %s88, 1
          %s796 = smul.addr %s795, 16
          %s797 = scalar_lea.vmem [#allocation7], %s796
          %798 = dma.done %s794, 256
        $region52: #{transformer_forward.17} parent=47 // pred_fallthru
          _
        // Predicated region
        $region53: #{transformer_forward.17} parent=47 // pred_check
          %p799 = pneg %p129
        $region54: #{transformer_forward.17} parent=47 // pred_check_branch
          %801 = sbr.rel (%p799) target = $region56
        $region55: #{transformer_forward.17} parent=47 // pred_region
          %s802 = sand.u32 %s114, 1
          %s803 = scalar_lea.sflag [#allocation9], %s802
          %s804 = sand.u32 %s114, 1
          %s805 = smul.addr %s804, 4
          %s806 = scalar_lea.vmem [#allocation8], %s805
          %807 = dma.done %s803, 64
        $region56: #{transformer_forward.17} parent=47 // pred_fallthru
          _
      $region48: #{transformer_forward.17} parent=5 // pred_fallthru
        _
    $region6: #{transformer_forward.17} parent=1 // loop_footer
      %s26 = sadd.s32 1, %s22
    $region7: #{transformer_forward.17} parent=1 // loop_footer_branch
      %21 = sbr.rel target = $region3
    $region8: #{transformer_forward.17} parent=1 // loop_exit
      _
    %808 = vsyncpa [#allocation3], 1
    %s809 = scalar_lea.sflag [#allocation3], 1
    %810 = vsyncpa %s809, 1
    %811 = vsyncpa [#allocation6], 1
    %s812 = scalar_lea.sflag [#allocation6], 1
    %813 = vsyncpa %s812, 1
    %814 = vsyncpa [#allocation4], 1
    %s815 = scalar_lea.sflag [#allocation4], 1
    %816 = vsyncpa %s815, 1
    %817 = vsyncpa [#allocation9], 1
    %s818 = scalar_lea.sflag [#allocation9], 1
    %819 = vsyncpa %s818, 1

// kernel: transformer_forward.20
$region0: #{transformer_forward.20}
  #allocation0 [shape = 'u32[]', space=smem, size = 0x4, offset = 0x4, fixed_abs, tag = 'smem constant byte address 0x4 - core index']
  #allocation1 [shape = 'u32[144,128]{1,0:T(1,128)}', space=vmem, size = 0x12000, scoped, tag = 'internal scratch']
  %s0 = inlined_call_operand.hbm [shape: bf16[16,32], index: 0, kind: input, shape index: {}]
  %s1 = inlined_call_operand.hbm [shape: bf16[32,64], index: 1, kind: input, shape index: {}]
  %s2 = inlined_call_operand.hbm [shape: f32[1,64], index: 2, kind: input, shape index: {}]
  %s3 = inlined_call_operand.hbm [shape: bf16[16,64], index: 3, kind: output, shape index: {}]
  %s4 = sld [smem:[#allocation0]]
  $region34: #{transformer_forward.20} parent=0
    _
  %s6 = ssub.s32 1, %s4
  %s7 = scalar_select 0, %s6, %s4
  $region1: #{transformer_forward.20} parent=0
    #allocation2 [shape = 'u8[4096]{0}', space=vmem, size = 0x1000, scoped, tag = 'input window, operand 0, single buffered']
    #allocation3 [shape = 's32[1]{0}', space=sflag, size = 0x4, scoped, tag = 'scoped memory for transformer_forward.20']
    #allocation4 [shape = 's32[1]{0}', space=sflag, size = 0x4, scoped, tag = 'scoped memory for transformer_forward.20']
    #allocation5 [shape = 'u8[8192]{0}', space=vmem, size = 0x2000, scoped, tag = 'input window, operand 1, single buffered']
    #allocation6 [shape = 's32[1]{0}', space=sflag, size = 0x4, scoped, tag = 'scoped memory for transformer_forward.20']
    #allocation7 [shape = 'u8[512]{0}', space=vmem, size = 0x400, scoped, tag = 'input window, operand 2, single buffered']
    #allocation8 [shape = 'u8[4096]{0}', space=vmem, size = 0x1000, scoped, tag = 'output window, operand 0, single buffered']
    %8 = vsyncpa [#allocation3], 0
    %9 = vsyncpa [#allocation6], 0
    %10 = vsyncpa [#allocation4], 0
    // Predicated region
    $region2: #{transformer_forward.20} parent=1 // pred_check
      _
    $region3: #{transformer_forward.20} parent=1 // pred_check_branch
      %12 = sbr.rel (0) target = $region5
    $region4: #{transformer_forward.20} parent=1 // pred_region
      %s14 = ssub.s32 128, 128
      %15 = vsyncadd [#allocation3], %s14
      %s16 = sshll.u32 [#allocation2], 4
      %s17 = int_to_ptr.vmem [resolvable:$true] %s16
      %22 = dma.hbm_to_vmem [thread:$0]  %s0, 128, %s17, [#allocation3], 64, 64, 4
    $region5: #{transformer_forward.20} parent=1 // pred_fallthru
      _
    // Predicated region
    $region6: #{transformer_forward.20} parent=1 // pred_check
      _
    $region7: #{transformer_forward.20} parent=1 // pred_check_branch
      %24 = sbr.rel (0) target = $region9
    $region8: #{transformer_forward.20} parent=1 // pred_region
      %s26 = ssub.s32 256, 256
      %27 = vsyncadd [#allocation6], %s26
      %s28 = sshll.u32 [#allocation5], 4
      %s29 = int_to_ptr.vmem [resolvable:$true] %s28
      %34 = dma.hbm_to_vmem [thread:$0]  %s1, 256, %s29, [#allocation6], 64, 64, 4
    $region9: #{transformer_forward.20} parent=1 // pred_fallthru
      _
    // Predicated region
    $region10: #{transformer_forward.20} parent=1 // pred_check
      _
    $region11: #{transformer_forward.20} parent=1 // pred_check_branch
      %36 = sbr.rel (0) target = $region13
    $region12: #{transformer_forward.20} parent=1 // pred_region
      %s38 = ssub.s32 16, 16
      %39 = vsyncadd [#allocation6], %s38
      %s41 = sshll.u32 [#allocation7], 4
      %s42 = int_to_ptr.vmem [resolvable:$true] %s41
      %44 = dma.hbm_to_vmem [thread:$0]  %s2, 16, %s42, [#allocation6]
    $region13: #{transformer_forward.20} parent=1 // pred_fallthru
      _
    // Predicated region
    $region14: #{transformer_forward.20} parent=1 // pred_check
      _
    $region15: #{transformer_forward.20} parent=1 // pred_check_branch
      %46 = sbr.rel (0) target = $region17
    $region16: #{transformer_forward.20} parent=1 // pred_region
      %47 = dma.done [#allocation3], 128
    $region17: #{transformer_forward.20} parent=1 // pred_fallthru
      _
    // Predicated region
    $region18: #{transformer_forward.20} parent=1 // pred_check
      _
    $region19: #{transformer_forward.20} parent=1 // pred_check_branch
      %49 = sbr.rel (0) target = $region21
    $region20: #{transformer_forward.20} parent=1 // pred_region
      %50 = dma.done [#allocation6], 256
    $region21: #{transformer_forward.20} parent=1 // pred_fallthru
      _
    // Predicated region
    $region22: #{transformer_forward.20} parent=1 // pred_check
      _
    $region23: #{transformer_forward.20} parent=1 // pred_check_branch
      %52 = sbr.rel (0) target = $region25
    $region24: #{transformer_forward.20} parent=1 // pred_region
      %53 = dma.done [#allocation6], 16
    $region25: #{transformer_forward.20} parent=1 // pred_fallthru
      _
    %v55 = vld [vmem:[#allocation2] sm:$0xf]
    %v56 = vld [vmem:[#allocation2 + $0x4] sm:$0xf]
    %v57 = vld [vmem:[#allocation5] sm:$0xf]
    %v58 = vld [vmem:[#allocation5 + $0x4] sm:$0xf]
    %v59 = vld [vmem:[#allocation5 + $0x8] sm:$0xf]
    %v60 = vld [vmem:[#allocation5 + $0xc] sm:$0xf]
    %v61 = vld [vmem:[#allocation7] sm:$0x1]
    %v63 = vlaneseq
    %v64 = vshrl.u32 %v63, 7
    %v65 = vsub.s32 0, %v64
    %v66 = vrot.slane %v61, %v65
    %v70 = vunpack.c.l.b16 %v55
    %v71 = vunpack.c.l.b16 %v56
    %v72 = vpack.c.b16 %v71, %v70
    %v77 = vunpack.c.l.b16 %v57
    %v78 = vunpack.c.l.b16 %v58
    %v79 = vunpack.c.l.b16 %v59
    %v80 = vunpack.c.l.b16 %v60
    %v81 = vpack.c.b16 %v78, %v77
    %v82 = vpack.c.b16 %v80, %v79
    %vm85 = vcmask 261120
    %v87 = vsel %vm85, %v72, 0
    %89 = vmatprep.subr.bf16.mxu0 0
    %90 = vmatpush1.bf16.msra.mxu0 %v81
    %91 = vmatprep.subr.bf16.mxu0 0
    %92 = vmatpush1.bf16.msra.mxu0 %v82
    %93 = vmatprep.subr.bf16.mxu0 0
    %94 = vmatpush1.bf16.msra.mxu0 0
    %95 = vmatprep.subr.bf16.mxu0 0
    %96 = vmatpush1.bf16.msra.mxu0 0
    %97 = vmatprep.subr.bf16.mxu0 0
    %98 = vmatpush1.bf16.msra.mxu0 0
    %99 = vmatprep.subr.bf16.mxu0 0
    %100 = vmatpush1.bf16.msra.mxu0 0
    %101 = vmatprep.subr.bf16.mxu0 0
    %102 = vmatpush1.bf16.msra.mxu0 0
    %103 = vmatprep.subr.bf16.mxu0 0
    %104 = vmatpush1.bf16.msra.mxu0 0
    %105 = vmatprep.subr.bf16.mxu0 0
    %106 = vmatpush1.bf16.msra.mxu0 0
    %107 = vmatprep.subr.bf16.mxu0 0
    %108 = vmatpush1.bf16.msra.mxu0 0
    %109 = vmatprep.subr.bf16.mxu0 0
    %110 = vmatpush1.bf16.msra.mxu0 0
    %111 = vmatprep.subr.bf16.mxu0 0
    %112 = vmatpush1.bf16.msra.mxu0 0
    %113 = vmatprep.subr.bf16.mxu0 0
    %114 = vmatpush1.bf16.msra.mxu0 0
    %115 = vmatprep.subr.bf16.mxu0 0
    %116 = vmatpush1.bf16.msra.mxu0 0
    %117 = vmatprep.subr.bf16.mxu0 0
    %118 = vmatpush1.bf16.msra.mxu0 0
    %119 = vmatprep.subr.bf16.mxu0 0
    %120 = vmatpush1.bf16.msra.mxu0 0
    %121 = vmatprep.mubr.bf16.mxu0 0
    %122 = vmatmul.mubr.bf16.gmra.mrb[0].mxu0 %v87
    %v123 = vpop.f32.mrb[0].mxu0
    %v124 = vadd.f32 %v66, %v123
    %v125 = vpop.f32.mrb[0].mxu0
    %v126 = vpop.f32.mrb[0].mxu0
    %v127 = vadd.f32 %v66, %v126
    %v128 = vpop.f32.mrb[0].mxu0
    %129 = vdwg.mxu0
    %v130 = vmul.f32 %v124, %v124
    %v131 = vmul.f32 %v127, %v127
    %v132 = vmul.f32 %v124, %v130
    %v133 = vmul.f32 %v127, %v131
    %v134 = vmul.f32 %v132, 0.044715
    %v135 = vmul.f32 %v133, 0.044715
    %v136 = vadd.f32 %v124, %v134
    %v137 = vadd.f32 %v127, %v135
    %v138 = vmul.f32 %v136, 0.7978846
    %v139 = vmul.f32 %v137, 0.7978846
    %v140 = vtanh.pop %v138
    %v141 = vtanh.pop %v139
    %v142 = vadd.f32 %v140, 1.0
    %v143 = vadd.f32 %v141, 1.0
    %v144 = vmul.f32 %v142, 0.5
    %v145 = vmul.f32 %v143, 0.5
    %v146 = vmul.f32 %v124, %v144
    %v147 = vmul.f32 %v127, %v145
    %v148 = vpack.c.bf16 %v147, %v146
    %v150 = vunpack.c.l.b16 %v148
    %v151 = vunpack.c.h.b16 %v148
    %v152 = vpack.c.b16 %v150, %v150
    %v153 = vpack.c.b16 %v151, %v151
    %vm156 = vcmask 519168
    %157 = vst.msk [vmem:[#allocation8] sm:$0xf] %vm156, %v152
    %158 = vst.msk [vmem:[#allocation8 + $0x4] sm:$0xf] %vm156, %v153
    // Predicated region
    $region26: #{transformer_forward.20} parent=1 // pred_check
      _
    $region27: #{transformer_forward.20} parent=1 // pred_check_branch
      %160 = sbr.rel (0) target = $region29
    $region28: #{transformer_forward.20} parent=1 // pred_region
      %s162 = ssub.s32 128, 128
      %163 = vsyncadd [#allocation4], %s162
      %s164 = sshll.u32 [#allocation8], 4
      %s165 = int_to_ptr.vmem [resolvable:$true] %s164
      %170 = dma.vmem_to_hbm [thread:$0]  %s165, 128, %s3, [#allocation4], 64, 64, 4
    $region29: #{transformer_forward.20} parent=1 // pred_fallthru
      _
    // Predicated region
    $region30: #{transformer_forward.20} parent=1 // pred_check
      _
    $region31: #{transformer_forward.20} parent=1 // pred_check_branch
      %172 = sbr.rel (0) target = $region33
    $region32: #{transformer_forward.20} parent=1 // pred_region
      %173 = dma.done [#allocation4], 128
    $region33: #{transformer_forward.20} parent=1 // pred_fallthru
      _
    %174 = vsyncpa [#allocation3], 1
    %175 = vsyncpa [#allocation6], 1
    %176 = vsyncpa [#allocation4], 1

// kernel: transformer_forward.19
$region0: #{transformer_forward.19}
  #allocation0 [shape = 'u32[]', space=smem, size = 0x4, offset = 0x4, fixed_abs, tag = 'smem constant byte address 0x4 - core index']
  #allocation1 [shape = 'u32[144,128]{1,0:T(1,128)}', space=vmem, size = 0x12000, scoped, tag = 'internal scratch']
  %s0 = inlined_call_operand.hbm [shape: bf16[16,32], index: 0, kind: input, shape index: {}]
  %s1 = inlined_call_operand.hbm [shape: bf16[16,32], index: 1, kind: input, shape index: {}]
  %s2 = inlined_call_operand.hbm [shape: f32[1,32], index: 2, kind: input, shape index: {}]
  %s3 = inlined_call_operand.hbm [shape: f32[1,32], index: 3, kind: input, shape index: {}]
  %s4 = inlined_call_operand.hbm [shape: bf16[16,32], index: 4, kind: output, shape index: {}]
  %s5 = sld [smem:[#allocation0]]
  $region42: #{transformer_forward.19} parent=0
    _
  %s7 = ssub.s32 1, %s5
  %s8 = scalar_select 0, %s7, %s5
  $region1: #{transformer_forward.19} parent=0
    #allocation2 [shape = 'u8[4096]{0}', space=vmem, size = 0x1000, scoped, tag = 'input window, operand 0, single buffered']
    #allocation3 [shape = 's32[1]{0}', space=sflag, size = 0x4, scoped, tag = 'scoped memory for transformer_forward.19']
    #allocation4 [shape = 's32[1]{0}', space=sflag, size = 0x4, scoped, tag = 'scoped memory for transformer_forward.19']
    #allocation5 [shape = 'u8[4096]{0}', space=vmem, size = 0x1000, scoped, tag = 'input window, operand 1, single buffered']
    #allocation6 [shape = 's32[1]{0}', space=sflag, size = 0x4, scoped, tag = 'scoped memory for transformer_forward.19']
    #allocation7 [shape = 'u8[512]{0}', space=vmem, size = 0x400, scoped, tag = 'input window, operand 2, single buffered']
    #allocation8 [shape = 'u8[512]{0}', space=vmem, size = 0x400, scoped, tag = 'input window, operand 3, single buffered']
    #allocation9 [shape = 's32[1]{0}', space=sflag, size = 0x4, scoped, tag = 'scoped memory for transformer_forward.19']
    #allocation10 [shape = 'u8[4096]{0}', space=vmem, size = 0x1000, scoped, tag = 'output window, operand 0, single buffered']
    %9 = vsyncpa [#allocation3], 0
    %10 = vsyncpa [#allocation6], 0
    %11 = vsyncpa [#allocation9], 0
    %12 = vsyncpa [#allocation4], 0
    // Predicated region
    $region2: #{transformer_forward.19} parent=1 // pred_check
      _
    $region3: #{transformer_forward.19} parent=1 // pred_check_branch
      %14 = sbr.rel (0) target = $region5
    $region4: #{transformer_forward.19} parent=1 // pred_region
      %s16 = ssub.s32 128, 128
      %17 = vsyncadd [#allocation3], %s16
      %s18 = sshll.u32 [#allocation2], 4
      %s19 = int_to_ptr.vmem [resolvable:$true] %s18
      %24 = dma.hbm_to_vmem [thread:$0]  %s0, 128, %s19, [#allocation3], 64, 64, 4
    $region5: #{transformer_forward.19} parent=1 // pred_fallthru
      _
    // Predicated region
    $region6: #{transformer_forward.19} parent=1 // pred_check
      _
    $region7: #{transformer_forward.19} parent=1 // pred_check_branch
      %26 = sbr.rel (0) target = $region9
    $region8: #{transformer_forward.19} parent=1 // pred_region
      %s28 = ssub.s32 128, 128
      %29 = vsyncadd [#allocation6], %s28
      %s30 = sshll.u32 [#allocation5], 4
      %s31 = int_to_ptr.vmem [resolvable:$true] %s30
      %36 = dma.hbm_to_vmem [thread:$0]  %s1, 128, %s31, [#allocation6], 64, 64, 4
    $region9: #{transformer_forward.19} parent=1 // pred_fallthru
      _
    // Predicated region
    $region10: #{transformer_forward.19} parent=1 // pred_check
      _
    $region11: #{transformer_forward.19} parent=1 // pred_check_branch
      %38 = sbr.rel (0) target = $region13
    $region12: #{transformer_forward.19} parent=1 // pred_region
      %s40 = ssub.s32 16, 16
      %41 = vsyncadd [#allocation6], %s40
      %s43 = sshll.u32 [#allocation7], 4
      %s44 = int_to_ptr.vmem [resolvable:$true] %s43
      %46 = dma.hbm_to_vmem [thread:$0]  %s2, 16, %s44, [#allocation6]
    $region13: #{transformer_forward.19} parent=1 // pred_fallthru
      _
    // Predicated region
    $region14: #{transformer_forward.19} parent=1 // pred_check
      _
    $region15: #{transformer_forward.19} parent=1 // pred_check_branch
      %48 = sbr.rel (0) target = $region17
    $region16: #{transformer_forward.19} parent=1 // pred_region
      %s50 = ssub.s32 16, 16
      %51 = vsyncadd [#allocation9], %s50
      %s53 = sshll.u32 [#allocation8], 4
      %s54 = int_to_ptr.vmem [resolvable:$true] %s53
      %56 = dma.hbm_to_vmem [thread:$0]  %s3, 16, %s54, [#allocation9]
    $region17: #{transformer_forward.19} parent=1 // pred_fallthru
      _
    // Predicated region
    $region18: #{transformer_forward.19} parent=1 // pred_check
      _
    $region19: #{transformer_forward.19} parent=1 // pred_check_branch
      %58 = sbr.rel (0) target = $region21
    $region20: #{transformer_forward.19} parent=1 // pred_region
      %59 = dma.done [#allocation3], 128
    $region21: #{transformer_forward.19} parent=1 // pred_fallthru
      _
    // Predicated region
    $region22: #{transformer_forward.19} parent=1 // pred_check
      _
    $region23: #{transformer_forward.19} parent=1 // pred_check_branch
      %61 = sbr.rel (0) target = $region25
    $region24: #{transformer_forward.19} parent=1 // pred_region
      %62 = dma.done [#allocation6], 128
    $region25: #{transformer_forward.19} parent=1 // pred_fallthru
      _
    // Predicated region
    $region26: #{transformer_forward.19} parent=1 // pred_check
      _
    $region27: #{transformer_forward.19} parent=1 // pred_check_branch
      %64 = sbr.rel (0) target = $region29
    $region28: #{transformer_forward.19} parent=1 // pred_region
      %65 = dma.done [#allocation6], 16
    $region29: #{transformer_forward.19} parent=1 // pred_fallthru
      _
    // Predicated region
    $region30: #{transformer_forward.19} parent=1 // pred_check
      _
    $region31: #{transformer_forward.19} parent=1 // pred_check_branch
      %67 = sbr.rel (0) target = $region33
    $region32: #{transformer_forward.19} parent=1 // pred_region
      %68 = dma.done [#allocation9], 16
    $region33: #{transformer_forward.19} parent=1 // pred_fallthru
      _
    %v69 = vld [vmem:[#allocation2] sm:$0xf]
    %v70 = vld [vmem:[#allocation2 + $0x4] sm:$0xf]
    %v71 = vunpack.c.l.bf16 %v69
    %v72 = vunpack.c.l.bf16 %v70
    %v73 = vld [vmem:[#allocation5] sm:$0xf]
    %v74 = vld [vmem:[#allocation5 + $0x4] sm:$0xf]
    %v75 = vunpack.c.l.bf16 %v73
    %v76 = vunpack.c.l.bf16 %v74
    %v77 = vadd.f32 %v71, %v75
    %v78 = vadd.f32 %v72, %v76
    %vm79 = vcmask 261120
    %v80 = vsel %vm79, %v77, 0.0
    %81 = vadd.xlane.f32.xlu0 %v80
    %v82 = vpop.xlane.xlu0 %81
    %v83 = vsel %vm79, %v78, 0.0
    %84 = vadd.xlane.f32.xlu0 %v83
    %v85 = vpop.xlane.xlu0 %84
    %v86 = vrcp.pop 32.0
    %v87 = vmul.f32 %v82, %v86
    %v88 = vmul.f32 %v85, %v86
    %v89 = vsub.f32 %v77, %v87
    %v90 = vsub.f32 %v78, %v88
    %v91 = vmul.f32 %v89, %v89
    %v92 = vmul.f32 %v90, %v90
    %v93 = vsel %vm79, %v91, 0.0
    %94 = vadd.xlane.f32.xlu0 %v93
    %v95 = vpop.xlane.xlu0 %94
    %v96 = vsel %vm79, %v92, 0.0
    %97 = vadd.xlane.f32.xlu0 %v96
    %v98 = vpop.xlane.xlu0 %97
    %v99 = vmul.f32 %v95, %v86
    %v100 = vmul.f32 %v98, %v86
    %v101 = vadd.f32 %v99, 1e-12
    %v102 = vadd.f32 %v100, 1e-12
    %v103 = vrsqrt.pop %v101
    %v104 = vrsqrt.pop %v102
    %v105 = vmul.f32 %v89, %v103
    %v106 = vmul.f32 %v90, %v104
    %v107 = vld [vmem:[#allocation7] sm:$0x1]
    %v109 = vlaneseq
    %v110 = vshrl.u32 %v109, 7
    %v111 = vsub.s32 0, %v110
    %v112 = vrot.slane %v107, %v111
    %v114 = vmul.f32 %v105, %v112
    %v115 = vmul.f32 %v106, %v112
    %v116 = vld [vmem:[#allocation8] sm:$0x1]
    %v118 = vlaneseq
    %v119 = vshrl.u32 %v118, 7
    %v120 = vsub.s32 0, %v119
    %v121 = vrot.slane %v116, %v120
    %v123 = vadd.f32 %v114, %v121
    %v124 = vadd.f32 %v115, %v121
    %v125 = vpack.c.bf16 %v124, %v123
    %v127 = vunpack.c.l.b16 %v125
    %v128 = vunpack.c.h.b16 %v125
    %v129 = vpack.c.b16 %v127, %v127
    %v130 = vpack.c.b16 %v128, %v128
    %vm133 = vcmask 257024
    %134 = vst.msk [vmem:[#allocation10] sm:$0xf] %vm133, %v129
    %135 = vst.msk [vmem:[#allocation10 + $0x4] sm:$0xf] %vm133, %v130
    // Predicated region
    $region34: #{transformer_forward.19} parent=1 // pred_check
      _
    $region35: #{transformer_forward.19} parent=1 // pred_check_branch
      %137 = sbr.rel (0) target = $region37
    $region36: #{transformer_forward.19} parent=1 // pred_region
      %s139 = ssub.s32 128, 128
      %140 = vsyncadd [#allocation4], %s139
      %s141 = sshll.u32 [#allocation10], 4
      %s142 = int_to_ptr.vmem [resolvable:$true] %s141
      %147 = dma.vmem_to_hbm [thread:$0]  %s142, 128, %s4, [#allocation4], 64, 64, 4
    $region37: #{transformer_forward.19} parent=1 // pred_fallthru
      _
    // Predicated region
    $region38: #{transformer_forward.19} parent=1 // pred_check
      _
    $region39: #{transformer_forward.19} parent=1 // pred_check_branch
      %149 = sbr.rel (0) target = $region41
    $region40: #{transformer_forward.19} parent=1 // pred_region
      %150 = dma.done [#allocation4], 128
    $region41: #{transformer_forward.19} parent=1 // pred_fallthru
      _
    %151 = vsyncpa [#allocation3], 1
    %152 = vsyncpa [#allocation6], 1
    %153 = vsyncpa [#allocation9], 1
    %154 = vsyncpa [#allocation4], 1

// kernel: transformer_forward.21
$region0: #{transformer_forward.21}
  #allocation0 [shape = 'u32[]', space=smem, size = 0x4, offset = 0x4, fixed_abs, tag = 'smem constant byte address 0x4 - core index']
  #allocation1 [shape = 'u32[144,128]{1,0:T(1,128)}', space=vmem, size = 0x12000, scoped, tag = 'internal scratch']
  %s0 = inlined_call_operand.hbm [shape: bf16[16,64], index: 0, kind: input, shape index: {}]
  %s1 = inlined_call_operand.hbm [shape: bf16[64,32], index: 1, kind: input, shape index: {}]
  %s2 = inlined_call_operand.hbm [shape: f32[1,32], index: 2, kind: input, shape index: {}]
  %s3 = inlined_call_operand.hbm [shape: bf16[16,32], index: 3, kind: output, shape index: {}]
  %s4 = sld [smem:[#allocation0]]
  $region34: #{transformer_forward.21} parent=0
    _
  %s6 = ssub.s32 1, %s4
  %s7 = scalar_select 0, %s6, %s4
  $region1: #{transformer_forward.21} parent=0
    #allocation2 [shape = 'u8[4096]{0}', space=vmem, size = 0x1000, scoped, tag = 'input window, operand 0, single buffered']
    #allocation3 [shape = 's32[1]{0}', space=sflag, size = 0x4, scoped, tag = 'scoped memory for transformer_forward.21']
    #allocation4 [shape = 's32[1]{0}', space=sflag, size = 0x4, scoped, tag = 'scoped memory for transformer_forward.21']
    #allocation5 [shape = 'u8[16384]{0}', space=vmem, size = 0x4000, scoped, tag = 'input window, operand 1, single buffered']
    #allocation6 [shape = 's32[1]{0}', space=sflag, size = 0x4, scoped, tag = 'scoped memory for transformer_forward.21']
    #allocation7 [shape = 'u8[512]{0}', space=vmem, size = 0x400, scoped, tag = 'input window, operand 2, single buffered']
    #allocation8 [shape = 'u8[4096]{0}', space=vmem, size = 0x1000, scoped, tag = 'output window, operand 0, single buffered']
    %8 = vsyncpa [#allocation3], 0
    %9 = vsyncpa [#allocation6], 0
    %10 = vsyncpa [#allocation4], 0
    // Predicated region
    $region2: #{transformer_forward.21} parent=1 // pred_check
      _
    $region3: #{transformer_forward.21} parent=1 // pred_check_branch
      %12 = sbr.rel (0) target = $region5
    $region4: #{transformer_forward.21} parent=1 // pred_region
      %s14 = ssub.s32 128, 128
      %15 = vsyncadd [#allocation3], %s14
      %s16 = sshll.u32 [#allocation2], 4
      %s17 = int_to_ptr.vmem [resolvable:$true] %s16
      %22 = dma.hbm_to_vmem [thread:$0]  %s0, 128, %s17, [#allocation3], 64, 64, 4
    $region5: #{transformer_forward.21} parent=1 // pred_fallthru
      _
    // Predicated region
    $region6: #{transformer_forward.21} parent=1 // pred_check
      _
    $region7: #{transformer_forward.21} parent=1 // pred_check_branch
      %24 = sbr.rel (0) target = $region9
    $region8: #{transformer_forward.21} parent=1 // pred_region
      %s26 = ssub.s32 512, 512
      %27 = vsyncadd [#allocation6], %s26
      %s28 = sshll.u32 [#allocation5], 4
      %s29 = int_to_ptr.vmem [resolvable:$true] %s28
      %34 = dma.hbm_to_vmem [thread:$0]  %s1, 512, %s29, [#allocation6], 64, 64, 4
    $region9: #{transformer_forward.21} parent=1 // pred_fallthru
      _
    // Predicated region
    $region10: #{transformer_forward.21} parent=1 // pred_check
      _
    $region11: #{transformer_forward.21} parent=1 // pred_check_branch
      %36 = sbr.rel (0) target = $region13
    $region12: #{transformer_forward.21} parent=1 // pred_region
      %s38 = ssub.s32 16, 16
      %39 = vsyncadd [#allocation6], %s38
      %s41 = sshll.u32 [#allocation7], 4
      %s42 = int_to_ptr.vmem [resolvable:$true] %s41
      %44 = dma.hbm_to_vmem [thread:$0]  %s2, 16, %s42, [#allocation6]
    $region13: #{transformer_forward.21} parent=1 // pred_fallthru
      _
    // Predicated region
    $region14: #{transformer_forward.21} parent=1 // pred_check
      _
    $region15: #{transformer_forward.21} parent=1 // pred_check_branch
      %46 = sbr.rel (0) target = $region17
    $region16: #{transformer_forward.21} parent=1 // pred_region
      %47 = dma.done [#allocation3], 128
    $region17: #{transformer_forward.21} parent=1 // pred_fallthru
      _
    // Predicated region
    $region18: #{transformer_forward.21} parent=1 // pred_check
      _
    $region19: #{transformer_forward.21} parent=1 // pred_check_branch
      %49 = sbr.rel (0) target = $region21
    $region20: #{transformer_forward.21} parent=1 // pred_region
      %50 = dma.done [#allocation6], 512
    $region21: #{transformer_forward.21} parent=1 // pred_fallthru
      _
    // Predicated region
    $region22: #{transformer_forward.21} parent=1 // pred_check
      _
    $region23: #{transformer_forward.21} parent=1 // pred_check_branch
      %52 = sbr.rel (0) target = $region25
    $region24: #{transformer_forward.21} parent=1 // pred_region
      %53 = dma.done [#allocation6], 16
    $region25: #{transformer_forward.21} parent=1 // pred_fallthru
      _
    %v55 = vld [vmem:[#allocation2] sm:$0xf]
    %v56 = vld [vmem:[#allocation2 + $0x4] sm:$0xf]
    %v57 = vld [vmem:[#allocation5] sm:$0xf]
    %v58 = vld [vmem:[#allocation5 + $0x4] sm:$0xf]
    %v59 = vld [vmem:[#allocation5 + $0x8] sm:$0xf]
    %v60 = vld [vmem:[#allocation5 + $0xc] sm:$0xf]
    %v61 = vld [vmem:[#allocation5 + $0x10] sm:$0xf]
    %v62 = vld [vmem:[#allocation5 + $0x14] sm:$0xf]
    %v63 = vld [vmem:[#allocation5 + $0x18] sm:$0xf]
    %v64 = vld [vmem:[#allocation5 + $0x1c] sm:$0xf]
    %v65 = vld [vmem:[#allocation7] sm:$0x1]
    %v67 = vlaneseq
    %v68 = vshrl.u32 %v67, 7
    %v69 = vsub.s32 0, %v68
    %v70 = vrot.slane %v65, %v69
    %v74 = vunpack.c.l.b16 %v55
    %v75 = vunpack.c.l.b16 %v56
    %v76 = vpack.c.b16 %v75, %v74
    %v85 = vunpack.c.l.b16 %v57
    %v86 = vunpack.c.l.b16 %v58
    %v87 = vunpack.c.l.b16 %v59
    %v88 = vunpack.c.l.b16 %v60
    %v89 = vunpack.c.l.b16 %v61
    %v90 = vunpack.c.l.b16 %v62
    %v91 = vunpack.c.l.b16 %v63
    %v92 = vunpack.c.l.b16 %v64
    %v93 = vpack.c.b16 %v86, %v85
    %v94 = vpack.c.b16 %v88, %v87
    %v95 = vpack.c.b16 %v90, %v89
    %v96 = vpack.c.b16 %v92, %v91
    %vm101 = vcmask 523264
    %v103 = vsel %vm101, %v76, 0
    %105 = vmatprep.subr.bf16.mxu0 0
    %106 = vmatpush1.bf16.msra.mxu0 %v93
    %107 = vmatprep.subr.bf16.mxu0 0
    %108 = vmatpush1.bf16.msra.mxu0 %v94
    %109 = vmatprep.subr.bf16.mxu0 0
    %110 = vmatpush1.bf16.msra.mxu0 %v95
    %111 = vmatprep.subr.bf16.mxu0 0
    %112 = vmatpush1.bf16.msra.mxu0 %v96
    %113 = vmatprep.subr.bf16.mxu0 0
    %114 = vmatpush1.bf16.msra.mxu0 0
    %115 = vmatprep.subr.bf16.mxu0 0
    %116 = vmatpush1.bf16.msra.mxu0 0
    %117 = vmatprep.subr.bf16.mxu0 0
    %118 = vmatpush1.bf16.msra.mxu0 0
    %119 = vmatprep.subr.bf16.mxu0 0
    %120 = vmatpush1.bf16.msra.mxu0 0
    %121 = vmatprep.subr.bf16.mxu0 0
    %122 = vmatpush1.bf16.msra.mxu0 0
    %123 = vmatprep.subr.bf16.mxu0 0
    %124 = vmatpush1.bf16.msra.mxu0 0
    %125 = vmatprep.subr.bf16.mxu0 0
    %126 = vmatpush1.bf16.msra.mxu0 0
    %127 = vmatprep.subr.bf16.mxu0 0
    %128 = vmatpush1.bf16.msra.mxu0 0
    %129 = vmatprep.subr.bf16.mxu0 0
    %130 = vmatpush1.bf16.msra.mxu0 0
    %131 = vmatprep.subr.bf16.mxu0 0
    %132 = vmatpush1.bf16.msra.mxu0 0
    %133 = vmatprep.subr.bf16.mxu0 0
    %134 = vmatpush1.bf16.msra.mxu0 0
    %135 = vmatprep.subr.bf16.mxu0 0
    %136 = vmatpush1.bf16.msra.mxu0 0
    %137 = vmatprep.mubr.bf16.mxu0 0
    %138 = vmatmul.mubr.bf16.gmra.mrb[0].mxu0 %v103
    %v139 = vpop.f32.mrb[0].mxu0
    %v140 = vadd.f32 %v70, %v139
    %v141 = vpop.f32.mrb[0].mxu0
    %v142 = vpop.f32.mrb[0].mxu0
    %v143 = vadd.f32 %v70, %v142
    %v144 = vpop.f32.mrb[0].mxu0
    %145 = vdwg.mxu0
    %v146 = vpack.c.bf16 %v143, %v140
    %v148 = vunpack.c.l.b16 %v146
    %v149 = vunpack.c.h.b16 %v146
    %v150 = vpack.c.b16 %v148, %v148
    %v151 = vpack.c.b16 %v149, %v149
    %vm154 = vcmask 257024
    %155 = vst.msk [vmem:[#allocation8] sm:$0xf] %vm154, %v150
    %156 = vst.msk [vmem:[#allocation8 + $0x4] sm:$0xf] %vm154, %v151
    // Predicated region
    $region26: #{transformer_forward.21} parent=1 // pred_check
      _
    $region27: #{transformer_forward.21} parent=1 // pred_check_branch
      %158 = sbr.rel (0) target = $region29
    $region28: #{transformer_forward.21} parent=1 // pred_region
      %s160 = ssub.s32 128, 128
      %161 = vsyncadd [#allocation4], %s160
      %s162 = sshll.u32 [#allocation8], 4
      %s163 = int_to_ptr.vmem [resolvable:$true] %s162
      %168 = dma.vmem_to_hbm [thread:$0]  %s163, 128, %s3, [#allocation4], 64, 64, 4
    $region29: #{transformer_forward.21} parent=1 // pred_fallthru
      _
    // Predicated region
    $region30: #{transformer_forward.21} parent=1 // pred_check
      _
    $region31: #{transformer_forward.21} parent=1 // pred_check_branch
      %170 = sbr.rel (0) target = $region33
    $region32: #{transformer_forward.21} parent=1 // pred_region
      %171 = dma.done [#allocation4], 128
    $region33: #{transformer_forward.21} parent=1 // pred_fallthru
      _
    %172 = vsyncpa [#allocation3], 1
    %173 = vsyncpa [#allocation6], 1
    %174 = vsyncpa [#allocation4], 1

</llo_original>
